<compile_context>
chip_gen: v7x
topology: tpu7x:2x2x1
jax: 0.10.0
libtpu: 0.0.40
codegen_flags: <defaults>
</compile_context>

<pallas_src>
import functools

import jax
import jax.numpy as jnp
from jax import lax
from jax.experimental import pallas as pl
from jax.experimental.pallas import tpu as pltpu


def _round_up(n, m):
    return ((n + m - 1) // m) * m


def _vmem_limit(needed_bytes, *, headroom=8 << 20, floor=32 << 20, cap=64 << 20):
    """Scoped-VMEM budget: needed + headroom, clamped to a v7x-safe cap."""
    return int(max(floor, min(needed_bytes + headroom, cap)))


# ---------------------------------------------------------------------------
# Row-tiled Linear kernel: out = x @ w + b   (weights resident across tiles)
# Used to hoist the LSTM input projection out of the recurrence.
# ---------------------------------------------------------------------------
def _linear_kernel(x_ref, w_ref, b_ref, o_ref):
    acc = jnp.dot(x_ref[...], w_ref[...],
                  preferred_element_type=jnp.float32) + b_ref[...]
    o_ref[...] = acc.astype(o_ref.dtype)


def linear_rows(x, w, b, *, out_dtype=jnp.bfloat16, tile_n=512):
    """x: (N,K) bf16; w: (K,M) bf16; b: (1,M) f32 -> (N,M) out_dtype."""
    N, K = x.shape
    M = w.shape[1]
    n8 = _round_up(N, 8)
    tile = min(tile_n, n8)
    n_pad = _round_up(n8, tile)
    if n_pad != N:
        x = jnp.pad(x, ((0, n_pad - N), (0, 0)))
    out_bytes = jnp.dtype(out_dtype).itemsize
    vmem = _vmem_limit(K * M * w.dtype.itemsize + M * 4
                       + 2 * tile * K * x.dtype.itemsize
                       + 2 * tile * M * out_bytes)
    out = pl.pallas_call(
        _linear_kernel,
        out_shape=jax.ShapeDtypeStruct((n_pad, M), out_dtype),
        grid=(n_pad // tile,),
        in_specs=[pl.BlockSpec((tile, K), lambda i: (i, 0)),
                  pl.BlockSpec((K, M), lambda i: (0, 0)),
                  pl.BlockSpec((1, M), lambda i: (0, 0))],
        out_specs=pl.BlockSpec((tile, M), lambda i: (i, 0)),
        compiler_params=pltpu.CompilerParams(
            dimension_semantics=("parallel",),
            vmem_limit_bytes=vmem),
    )(x, w, b)
    return out[:N] if n_pad != N else out


# ---------------------------------------------------------------------------
# LSTM recurrence kernel: grid over time-CHUNKS; TC timesteps iterated inside
# the kernel (unrolled fori_loop); h/c carried in f32 VMEM scratch.
# Gate columns are pre-ordered [i, f, o, g]; the input projection (incl. bias)
# is already folded into gx_ref, so each step only does h @ W_hh on the MXU.
# ---------------------------------------------------------------------------
def _lstm_chunk_kernel(gx_ref, whh_ref, h0_ref, c0_ref,
                       y_ref, hT_ref, cT_ref, h_scr, c_scr,
                       *, t_total, tc):
    chunk = pl.program_id(0)

    @pl.when(chunk == 0)
    def _():
        h_scr[...] = h0_ref[...]
        c_scr[...] = c0_ref[...]

    H = h_scr.shape[-1]
    whh = whh_ref[...]                  # (H, 4H) f32, loaded once per chunk
    t_base = chunk * tc

    def step(t, carry):
        h, c = carry                    # (B, H) f32
        gates = (gx_ref[t].astype(jnp.float32)
                 + jnp.dot(h, whh, preferred_element_type=jnp.float32))

        sig = jax.nn.sigmoid(gates[:, :3 * H])     # one EUP slab: [i | f | o]
        g_g = jnp.tanh(gates[:, 3 * H:])
        i_g = sig[:, 0:H]
        f_g = sig[:, H:2 * H]
        o_g = sig[:, 2 * H:3 * H]

        c_new = f_g * c + i_g * g_g
        h_new = o_g * jnp.tanh(c_new)

        y_ref[t] = h_new.astype(jnp.bfloat16)

        @pl.when(t_base + t == t_total - 1)        # true last timestep only
        def _():
            hT_ref[...] = h_new
            cT_ref[...] = c_new

        return (h_new, c_new)

    h_fin, c_fin = lax.fori_loop(0, tc, step, (h_scr[...], c_scr[...]),
                                 unroll=True)
    h_scr[...] = h_fin
    c_scr[...] = c_fin


def lstm_layer(gates_x, w_hh, h0, c0, *, chunk=32):
    """gates_x: (T,B,4H) bf16 (x-proj + bias); w_hh: (H,4H) f32; h0,c0: (B,H) f32."""
    T, B, G = gates_x.shape
    H = w_hh.shape[0]
    TC = min(chunk, T)
    T_pad = _round_up(T, TC)
    if T_pad != T:
        # Padded steps compute garbage-but-finite state; hT/cT are latched at
        # the true timestep T-1 inside the kernel, y padding is sliced off.
        gates_x = jnp.pad(gates_x, ((0, T_pad - T), (0, 0), (0, 0)))

    kernel = functools.partial(_lstm_chunk_kernel, t_total=T, tc=TC)
    y, hT, cT = pl.pallas_call(
        kernel,
        out_shape=(jax.ShapeDtypeStruct((T_pad, B, H), jnp.bfloat16),
                   jax.ShapeDtypeStruct((B, H), jnp.float32),
                   jax.ShapeDtypeStruct((B, H), jnp.float32)),
        grid_spec=pltpu.PrefetchScalarGridSpec(
            num_scalar_prefetch=0,
            grid=(T_pad // TC,),
            in_specs=[pl.BlockSpec((TC, B, G), lambda c: (c, 0, 0)),
                      pl.BlockSpec((H, G), lambda c: (0, 0)),
                      pl.BlockSpec((B, H), lambda c: (0, 0)),
                      pl.BlockSpec((B, H), lambda c: (0, 0))],
            out_specs=[pl.BlockSpec((TC, B, H), lambda c: (c, 0, 0)),
                       pl.BlockSpec((B, H), lambda c: (0, 0)),
                       pl.BlockSpec((B, H), lambda c: (0, 0))],
            scratch_shapes=[pltpu.VMEM((B, H), jnp.float32),
                            pltpu.VMEM((B, H), jnp.float32)]),
        compiler_params=pltpu.CompilerParams(
            dimension_semantics=("arbitrary",)),
    )(gates_x, w_hh, h0, c0)
    return (y[:T] if T_pad != T else y), hT, cT


def multilayer_lstm(x, layer_params, h0, c0, *, chunk=32):
    """x: (T,B,In); layer_params: list of (w_ih(In,4H) bf16, w_hh(H,4H) f32,
    b(1,4H) f32); h0,c0: (L,B,H) f32. Returns bf16 (T,B,H) output, f32 hT/cT."""
    T, B, _ = x.shape
    Bp = _round_up(B, 8)                       # sublane-align the batch
    pad_b = Bp - B
    if pad_b:
        x = jnp.pad(x, ((0, 0), (0, pad_b), (0, 0)))
        h0 = jnp.pad(h0, ((0, 0), (0, pad_b), (0, 0)))
        c0 = jnp.pad(c0, ((0, 0), (0, pad_b), (0, 0)))

    out = x.astype(jnp.bfloat16)
    hs, cs = [], []
    for l, (w_ih, w_hh, b) in enumerate(layer_params):
        In = out.shape[-1]
        H = w_hh.shape[0]
        # Hoisted input projection for the whole sequence (one big matmul),
        # emitted directly in bf16 (no f32 HBM round trip).
        gates_x = linear_rows(out.reshape(T * Bp, In), w_ih, b,
                              out_dtype=jnp.bfloat16).reshape(T, Bp, 4 * H)
        out, hT, cT = lstm_layer(gates_x, w_hh, h0[l], c0[l], chunk=chunk)
        # TODO(synk): inter-layer dropout is identity (eval mode).
        hs.append(hT)
        cs.append(cT)

    hT = jnp.stack(hs, axis=0)
    cT = jnp.stack(cs, axis=0)
    if pad_b:
        out = out[:, :B]
        hT = hT[:, :B]
        cT = cT[:, :B]
    return out, hT, cT


# ---------------------------------------------------------------------------
# Decoder: (optional residual add) + Linear(H -> Vp) fused with log_softmax
# over the (128-padded, lane-dense) vocab axis, row-tiled over N with the
# (H,Vp) weight resident across tiles.
# ---------------------------------------------------------------------------
def _logsoftmax_store(logits, o_ref):
    m = jnp.max(logits, axis=-1, keepdims=True)
    z = logits - m
    lse = jnp.log(jnp.sum(jnp.exp(z), axis=-1, keepdims=True))
    o_ref[...] = z - lse


def _decode_kernel(x_ref, w_ref, b_ref, o_ref):
    logits = (jnp.dot(x_ref[...], w_ref[...],
                      preferred_element_type=jnp.float32) + b_ref[...])
    _logsoftmax_store(logits, o_ref)


def _decode_fused_add_kernel(x1_ref, x2_ref, w_ref, b_ref, o_ref):
    # Residual add fused in-kernel (free VPU filler under the MXU/DMA work).
    x = (x1_ref[...].astype(jnp.float32)
         + x2_ref[...].astype(jnp.float32)).astype(jnp.bfloat16)
    logits = (jnp.dot(x, w_ref[...],
                      preferred_element_type=jnp.float32) + b_ref[...])
    _logsoftmax_store(logits, o_ref)


def decode_log_softmax(xs, w, b, v_out, *, tile_n=512):
    """xs: tuple of one or two (N,H) bf16 arrays (summed in-kernel);
    w: (H,Vp) bf16 with Vp multiple of 128; b: (1,Vp) f32 (padded cols -1e30).
    Returns log_softmax over the real vocab: (N, v_out) f32."""
    N, H = xs[0].shape
    Vp = w.shape[1]
    n8 = _round_up(N, 8)
    tile = min(tile_n, n8)
    n_pad = _round_up(n8, tile)
    if n_pad != N:
        xs = tuple(jnp.pad(x, ((0, n_pad - N), (0, 0))) for x in xs)
    kern = _decode_fused_add_kernel if len(xs) == 2 else _decode_kernel
    vmem = _vmem_limit(H * Vp * w.dtype.itemsize + Vp * 4
                       + 2 * len(xs) * tile * H * 2
                       + 2 * tile * Vp * 4)
    out = pl.pallas_call(
        kern,
        out_shape=jax.ShapeDtypeStruct((n_pad, Vp), jnp.float32),
        grid=(n_pad // tile,),
        in_specs=[pl.BlockSpec((tile, H), lambda i: (i, 0)) for _ in xs]
                 + [pl.BlockSpec((H, Vp), lambda i: (0, 0)),
                    pl.BlockSpec((1, Vp), lambda i: (0, 0))],
        out_specs=pl.BlockSpec((tile, Vp), lambda i: (i, 0)),
        compiler_params=pltpu.CompilerParams(
            dimension_semantics=("parallel",),
            vmem_limit_bytes=vmem),
    )(*xs, w, b)
    out = out[:N] if n_pad != N else out
    return out[:, :v_out] if Vp != v_out else out


# ---------------------------------------------------------------------------
# Parameter init (PyTorch layout) + prep into kernel layout.
# ---------------------------------------------------------------------------
def _uniform(key, shape, lo, hi):
    return jax.random.uniform(key, shape, jnp.float32, lo, hi)


def _init_torch_lstm(key, input_size, hidden_size, num_layers):
    k = 1.0 / float(hidden_size) ** 0.5
    layers = []
    for l in range(num_layers):
        key, k1, k2, k3, k4 = jax.random.split(key, 5)
        in_sz = input_size if l == 0 else hidden_size
        layers.append((
            _uniform(k1, (4 * hidden_size, in_sz), -k, k),        # w_ih (4H,In)
            _uniform(k2, (4 * hidden_size, hidden_size), -k, k),  # w_hh (4H,H)
            _uniform(k3, (4 * hidden_size,), -k, k),              # b_ih
            _uniform(k4, (4 * hidden_size,), -k, k),              # b_hh
        ))
    return layers


def _prepare_lstm(torch_layers):
    """PyTorch (i,f,g,o) row layout -> pre-transposed, (i,f,o,g) column layout.
    W_ih in bf16 (streamed matmul input), W_hh kept f32 (recurrence parity),
    fused f32 bias."""
    prepared = []
    for w_ih, w_hh, b_ih, b_hh in torch_layers:
        H = w_hh.shape[1]
        perm = jnp.concatenate([jnp.arange(0, H),            # i
                                jnp.arange(H, 2 * H),        # f
                                jnp.arange(3 * H, 4 * H),    # o
                                jnp.arange(2 * H, 3 * H)])   # g
        prepared.append((
            jnp.transpose(w_ih[perm]).astype(jnp.bfloat16),   # (In, 4H)
            jnp.transpose(w_hh[perm]).astype(jnp.float32),    # (H, 4H)
            (b_ih + b_hh)[perm].reshape(1, 4 * H).astype(jnp.float32),
        ))
    return prepared


def _prepare_decoder(w_torch):
    """PyTorch (V,H) weight -> (H, Vp) bf16 with vocab padded to mult of 128;
    bias (1, Vp) f32 with padded columns set to -1e30 (ignored by log_softmax)."""
    V, H = w_torch.shape
    Vp = _round_up(V, 128)
    wt = jnp.pad(jnp.transpose(w_torch), ((0, 0), (0, Vp - V)))
    bias = jnp.pad(jnp.zeros((V,), jnp.float32), (0, Vp - V),
                   constant_values=-1e30).reshape(1, Vp)
    return wt.astype(jnp.bfloat16), bias


def init_model_params(key, ntoken, npostag, ninp, npostagemb,
                      nhid, postagnhid, nlayers, postagnlayers):
    keys = jax.random.split(key, 6)
    initrange = 0.1
    dec_w, dec_b = _prepare_decoder(
        _uniform(keys[4], (ntoken, nhid), -initrange, initrange))
    pdec_w, pdec_b = _prepare_decoder(
        _uniform(keys[5], (npostag, postagnhid), -initrange, initrange))
    return {
        "encoder": _uniform(keys[0], (ntoken, ninp), -initrange, initrange),
        "postag_encoder": _uniform(keys[1], (npostag, npostagemb),
                                   -initrange, initrange),
        "rnn": _prepare_lstm(
            _init_torch_lstm(keys[2], ninp + npostagemb, nhid, nlayers)),
        "postag_rnn": _prepare_lstm(
            _init_torch_lstm(keys[3], npostagemb, postagnhid, postagnlayers)),
        "dec_w": dec_w, "dec_b": dec_b,
        "pdec_w": pdec_w, "pdec_b": pdec_b,
    }


# ---------------------------------------------------------------------------
# Forward pass (mirrors RNNModel.forward, LSTM variant, eval mode)
# ---------------------------------------------------------------------------
def rnn_model_forward(params, tokens, postags, hidden, hidden_postag,
                      *, ntoken, npostag):
    emb = params["encoder"][tokens]                 # (T,B,ninp) f32
    postag_emb = params["postag_encoder"][postags]  # (T,B,npostagemb) f32
    merge_emb = jnp.concatenate([emb, postag_emb], axis=2)

    h0, c0 = hidden
    output, hT, cT = multilayer_lstm(merge_emb, params["rnn"], h0, c0)

    ph0, pc0 = hidden_postag
    output_postag, phT, pcT = multilayer_lstm(postag_emb,
                                              params["postag_rnn"], ph0, pc0)

    assert output.shape == output_postag.shape, \
        "output + output_postag requires nhid == postagnhid"

    T, B, H = output.shape
    PH = output_postag.shape[-1]

    # Word decoder: residual add fused into the decoder kernel.
    decoded = decode_log_softmax(
        (output.reshape(T * B, H), output_postag.reshape(T * B, H)),
        params["dec_w"], params["dec_b"], ntoken)
    postag_decoded = decode_log_softmax(
        (output_postag.reshape(T * B, PH),),
        params["pdec_w"], params["pdec_b"], npostag)

    return (decoded.reshape(T, B, -1),
            postag_decoded.reshape(T, B, -1),
            (hT, cT),
            (phT, pcT))


if __name__ == "__main__":
    # Small, module-consistent shapes.
    ntoken, npostag = 50, 12
    ninp, npostagemb = 24, 8
    nhid, postagnhid = 32, 32          # equal so output + output_postag is valid
    nlayers, postagnlayers = 2, 1
    T, B = 8, 2

    key = jax.random.PRNGKey(0)
    pkey, tkey, gkey = jax.random.split(key, 3)

    params = init_model_params(pkey, ntoken, npostag, ninp, npostagemb,
                               nhid, postagnhid, nlayers, postagnlayers)

    tokens = jax.random.randint(tkey, (T, B), 0, ntoken, dtype=jnp.int32)
    postags = jax.random.randint(gkey, (T, B), 0, npostag, dtype=jnp.int32)

    # init_hidden(nlayers, B, nhid) for LSTM -> (h, c) zeros.
    hidden = (jnp.zeros((nlayers, B, nhid), jnp.float32),
              jnp.zeros((nlayers, B, nhid), jnp.float32))
    hidden_postag = (jnp.zeros((postagnlayers, B, postagnhid), jnp.float32),
                     jnp.zeros((postagnlayers, B, postagnhid), jnp.float32))

    fwd = jax.jit(functools.partial(rnn_model_forward,
                                    ntoken=ntoken, npostag=npostag))
    decoded, postag_decoded, new_hidden, new_hidden_postag = \
        fwd(params, tokens, postags, hidden, hidden_postag)

    jax.block_until_ready((decoded, postag_decoded,
                           new_hidden, new_hidden_postag))

    assert decoded.shape == (T, B, ntoken)
    assert postag_decoded.shape == (T, B, npostag)
    assert new_hidden[0].shape == (nlayers, B, nhid)
    assert new_hidden[1].shape == (nlayers, B, nhid)
    assert new_hidden_postag[0].shape == (postagnlayers, B, postagnhid)
    assert bool(jnp.all(jnp.isfinite(decoded)))
    assert bool(jnp.all(jnp.isfinite(postag_decoded)))
    # log_softmax rows should (approximately) sum to 1 in prob space.
    assert bool(jnp.all(jnp.abs(jnp.sum(jnp.exp(decoded), axis=-1) - 1.0) < 1e-3))
    print("KERNEL_OK")
</pallas_src>

<mosaic_0001>
module attributes {stable_mosaic.version = 11 : i64} {
  func.func @_linear_kernel(%arg0: i32, %arg1: memref<64x32xbf16, #tpu.memory_space<vmem>>, %arg2: memref<32x128xbf16, #tpu.memory_space<vmem>>, %arg3: memref<1x128xf32, #tpu.memory_space<vmem>>, %arg4: memref<64x128xbf16, #tpu.memory_space<vmem>>) attributes {dimension_semantics = [#tpu.dimension_semantics<parallel>], iteration_bounds = array<i64: 1>, scalar_prefetch = 0 : i64, scratch_operands = 0 : i64, tpu.core_type = #tpu.core_type<tc>, window_params = [{transform_indices = @transform_0, window_bounds = array<i64: 64, 32>}, {pipeline_mode = #tpu.pipeline_mode<synchronous>, transform_indices = @transform_1, window_bounds = array<i64: 32, 128>}, {pipeline_mode = #tpu.pipeline_mode<synchronous>, transform_indices = @transform_2, window_bounds = array<i64: 1, 128>}, {transform_indices = @transform_3, window_bounds = array<i64: 64, 128>}]} {
    %c0 = arith.constant 0 : index
    %c0_0 = arith.constant 0 : index
    %0 = vector.load %arg1[%c0, %c0_0] : memref<64x32xbf16, #tpu.memory_space<vmem>>, vector<64x32xbf16>
    %c0_1 = arith.constant 0 : index
    %c0_2 = arith.constant 0 : index
    %1 = vector.load %arg2[%c0_1, %c0_2] : memref<32x128xbf16, #tpu.memory_space<vmem>>, vector<32x128xbf16>
    %cst = arith.constant dense<0.000000e+00> : vector<64x128xf32>
    %2 = tpu.matmul %0, %1, %cst {dimension_numbers = #tpu.dot_dimension_numbers<[1], [0], [0], [1], [0, 0, 1, 1], [], []>} : vector<64x32xbf16>, vector<32x128xbf16>, vector<64x128xf32> -> vector<64x128xf32>
    %c0_3 = arith.constant 0 : index
    %c0_4 = arith.constant 0 : index
    %3 = vector.load %arg3[%c0_3, %c0_4] : memref<1x128xf32, #tpu.memory_space<vmem>>, vector<1x128xf32>
    %4 = vector.broadcast %3 : vector<1x128xf32> to vector<64x128xf32>
    %5 = arith.addf %2, %4 : vector<64x128xf32>
    %6 = arith.truncf %5 : vector<64x128xf32> to vector<64x128xbf16>
    %c0_5 = arith.constant 0 : index
    %c0_6 = arith.constant 0 : index
    %7 = vector.load %arg4[%c0_5, %c0_6] : memref<64x128xbf16, #tpu.memory_space<vmem>>, vector<64x128xbf16>
    tpu.vector_store %arg4[%c0_5, %c0_6], %6 {strides = array<i32>} : memref<64x128xbf16, #tpu.memory_space<vmem>>, vector<64x128xbf16>,
    return
  }
  func.func @transform_0(%arg0: i32) -> (i32, i32) {
    %c0_i32 = arith.constant 0 : i32
    %c0_i32_0 = arith.constant 0 : i32
    return %arg0, %c0_i32 : i32, i32
  }
  func.func @transform_1(%arg0: i32) -> (i32, i32) {
    %c0_i32 = arith.constant 0 : i32
    %c0_i32_0 = arith.constant 0 : i32
    %c0_i32_1 = arith.constant 0 : i32
    return %c0_i32, %c0_i32_0 : i32, i32
  }
  func.func @transform_2(%arg0: i32) -> (i32, i32) {
    %c0_i32 = arith.constant 0 : i32
    %c0_i32_0 = arith.constant 0 : i32
    %c0_i32_1 = arith.constant 0 : i32
    return %c0_i32, %c0_i32_0 : i32, i32
  }
  func.func @transform_3(%arg0: i32) -> (i32, i32) {
    %c0_i32 = arith.constant 0 : i32
    %c0_i32_0 = arith.constant 0 : i32
    return %arg0, %c0_i32 : i32, i32
  }
}

module attributes {stable_mosaic.version = 11 : i64} {
  func.func @_lstm_chunk_kernel(%arg0: i32, %arg1: memref<8x8x128xbf16, #tpu.memory_space<vmem>>, %arg2: memref<32x128xf32, #tpu.memory_space<vmem>>, %arg3: memref<8x32xf32, #tpu.memory_space<vmem>>, %arg4: memref<8x32xf32, #tpu.memory_space<vmem>>, %arg5: memref<8x8x32xbf16, #tpu.memory_space<vmem>>, %arg6: memref<8x32xf32, #tpu.memory_space<vmem>>, %arg7: memref<8x32xf32, #tpu.memory_space<vmem>>, %arg8: memref<8x32xf32, #tpu.memory_space<vmem>>, %arg9: memref<8x32xf32, #tpu.memory_space<vmem>>) attributes {dimension_semantics = [#tpu.dimension_semantics<arbitrary>], iteration_bounds = array<i64: 1>, scalar_prefetch = 0 : i64, scratch_operands = 2 : i64, tpu.core_type = #tpu.core_type<tc>, window_params = [{transform_indices = @transform_0, window_bounds = array<i64: 8, 8, 128>}, {pipeline_mode = #tpu.pipeline_mode<synchronous>, transform_indices = @transform_1, window_bounds = array<i64: 32, 128>}, {pipeline_mode = #tpu.pipeline_mode<synchronous>, transform_indices = @transform_2, window_bounds = array<i64: 8, 32>}, {pipeline_mode = #tpu.pipeline_mode<synchronous>, transform_indices = @transform_3, window_bounds = array<i64: 8, 32>}, {transform_indices = @transform_4, window_bounds = array<i64: 8, 8, 32>}, {pipeline_mode = #tpu.pipeline_mode<synchronous>, transform_indices = @transform_5, window_bounds = array<i64: 8, 32>}, {pipeline_mode = #tpu.pipeline_mode<synchronous>, transform_indices = @transform_6, window_bounds = array<i64: 8, 32>}]} {
    %c0_i32 = arith.constant 0 : i32
    %0 = arith.cmpi eq, %arg0, %c0_i32 : i32
    %1 = arith.extui %0 : i1 to i32
    %c0_i32_0 = arith.constant 0 : i32
    %2 = arith.cmpi ne, %1, %c0_i32_0 : i32
    scf.if %2 {
      %c0_75 = arith.constant 0 : index
      %c0_76 = arith.constant 0 : index
      %257 = vector.load %arg3[%c0_75, %c0_76] : memref<8x32xf32, #tpu.memory_space<vmem>>, vector<8x32xf32>
      %c0_77 = arith.constant 0 : index
      %c0_78 = arith.constant 0 : index
      %258 = vector.load %arg8[%c0_77, %c0_78] : memref<8x32xf32, #tpu.memory_space<vmem>>, vector<8x32xf32>
      tpu.vector_store %arg8[%c0_77, %c0_78], %257 {strides = array<i32>} : memref<8x32xf32, #tpu.memory_space<vmem>>, vector<8x32xf32>,
      %c0_79 = arith.constant 0 : index
      %c0_80 = arith.constant 0 : index
      %259 = vector.load %arg4[%c0_79, %c0_80] : memref<8x32xf32, #tpu.memory_space<vmem>>, vector<8x32xf32>
      %c0_81 = arith.constant 0 : index
      %c0_82 = arith.constant 0 : index
      %260 = vector.load %arg9[%c0_81, %c0_82] : memref<8x32xf32, #tpu.memory_space<vmem>>, vector<8x32xf32>
      tpu.vector_store %arg9[%c0_81, %c0_82], %259 {strides = array<i32>} : memref<8x32xf32, #tpu.memory_space<vmem>>, vector<8x32xf32>,
    } else {
    }
    %c0 = arith.constant 0 : index
    %c0_1 = arith.constant 0 : index
    %3 = vector.load %arg2[%c0, %c0_1] : memref<32x128xf32, #tpu.memory_space<vmem>>, vector<32x128xf32>
    %c8_i32 = arith.constant 8 : i32
    %4 = arith.muli %arg0, %c8_i32 : i32
    %c0_2 = arith.constant 0 : index
    %c0_3 = arith.constant 0 : index
    %5 = vector.load %arg8[%c0_2, %c0_3] : memref<8x32xf32, #tpu.memory_space<vmem>>, vector<8x32xf32>
    %c0_4 = arith.constant 0 : index
    %c0_5 = arith.constant 0 : index
    %6 = vector.load %arg9[%c0_4, %c0_5] : memref<8x32xf32, #tpu.memory_space<vmem>>, vector<8x32xf32>
    %c0_i32_6 = arith.constant 0 : i32
    %7 = arith.index_cast %c0_i32_6 : i32 to index
    %c0_7 = arith.constant 0 : index
    %c0_8 = arith.constant 0 : index
    %8 = vector.load %arg1[%7, %c0_7, %c0_8] : memref<8x8x128xbf16, #tpu.memory_space<vmem>>, vector<1x8x128xbf16>
    %9 = vector.shape_cast %8 : vector<1x8x128xbf16> to vector<8x128xbf16>
    %10 = arith.extf %9 : vector<8x128xbf16> to vector<8x128xf32>
    %cst = arith.constant dense<0.000000e+00> : vector<8x128xf32>
    %11 = tpu.matmul %5, %3, %cst {dimension_numbers = #tpu.dot_dimension_numbers<[1], [0], [0], [1], [0, 0, 1, 1], [], []>} : vector<8x32xf32>, vector<32x128xf32>, vector<8x128xf32> -> vector<8x128xf32>
    %12 = arith.addf %10, %11 : vector<8x128xf32>
    %13 = vector.extract_strided_slice %12 {offsets = [0, 0], sizes = [8, 96], strides = [1, 1]} : vector<8x128xf32> to vector<8x96xf32>
    %14 = arith.negf %13 : vector<8x96xf32>
    %15 = math.exp %14 : vector<8x96xf32>
    %cst_9 = arith.constant 1.000000e+00 : f32
    %16 = vector.broadcast %cst_9 : f32 to vector<8x96xf32>
    %17 = arith.addf %16, %15 : vector<8x96xf32>
    %18 = arith.divf %16, %17 : vector<8x96xf32>
    %19 = vector.extract_strided_slice %12 {offsets = [0, 96], sizes = [8, 32], strides = [1, 1]} : vector<8x128xf32> to vector<8x32xf32>
    %20 = math.tanh %19 : vector<8x32xf32>
    %21 = vector.extract_strided_slice %18 {offsets = [0, 0], sizes = [8, 32], strides = [1, 1]} : vector<8x96xf32> to vector<8x32xf32>
    %22 = vector.extract_strided_slice %18 {offsets = [0, 32], sizes = [8, 32], strides = [1, 1]} : vector<8x96xf32> to vector<8x32xf32>
    %23 = vector.extract_strided_slice %18 {offsets = [0, 64], sizes = [8, 32], strides = [1, 1]} : vector<8x96xf32> to vector<8x32xf32>
    %24 = arith.mulf %22, %6 : vector<8x32xf32>
    %25 = arith.mulf %21, %20 : vector<8x32xf32>
    %26 = arith.addf %24, %25 : vector<8x32xf32>
    %27 = math.tanh %26 : vector<8x32xf32>
    %28 = arith.mulf %23, %27 : vector<8x32xf32>
    %29 = arith.truncf %28 : vector<8x32xf32> to vector<8x32xbf16>
    %30 = arith.index_cast %c0_i32_6 : i32 to index
    %c0_10 = arith.constant 0 : index
    %c0_11 = arith.constant 0 : index
    %31 = vector.load %arg5[%30, %c0_10, %c0_11] : memref<8x8x32xbf16, #tpu.memory_space<vmem>>, vector<1x8x32xbf16>
    %32 = vector.shape_cast %31 : vector<1x8x32xbf16> to vector<8x32xbf16>
    %33 = vector.shape_cast %29 : vector<8x32xbf16> to vector<1x8x32xbf16>
    tpu.vector_store %arg5[%30, %c0_10, %c0_11], %33 {strides = array<i32>} : memref<8x8x32xbf16, #tpu.memory_space<vmem>>, vector<1x8x32xbf16>,
    %34 = arith.addi %4, %c0_i32_6 : i32
    %c7_i32 = arith.constant 7 : i32
    %35 = arith.cmpi eq, %34, %c7_i32 : i32
    %36 = arith.extui %35 : i1 to i32
    %c0_i32_12 = arith.constant 0 : i32
    %37 = arith.cmpi ne, %36, %c0_i32_12 : i32
    scf.if %37 {
      %c0_75 = arith.constant 0 : index
      %c0_76 = arith.constant 0 : index
      %257 = vector.load %arg6[%c0_75, %c0_76] : memref<8x32xf32, #tpu.memory_space<vmem>>, vector<8x32xf32>
      tpu.vector_store %arg6[%c0_75, %c0_76], %28 {strides = array<i32>} : memref<8x32xf32, #tpu.memory_space<vmem>>, vector<8x32xf32>,
      %c0_77 = arith.constant 0 : index
      %c0_78 = arith.constant 0 : index
      %258 = vector.load %arg7[%c0_77, %c0_78] : memref<8x32xf32, #tpu.memory_space<vmem>>, vector<8x32xf32>
      tpu.vector_store %arg7[%c0_77, %c0_78], %26 {strides = array<i32>} : memref<8x32xf32, #tpu.memory_space<vmem>>, vector<8x32xf32>,
    } else {
    }
    %c1_i32 = arith.constant 1 : i32
    %38 = arith.index_cast %c1_i32 : i32 to index
    %c0_13 = arith.constant 0 : index
    %c0_14 = arith.constant 0 : index
    %39 = vector.load %arg1[%38, %c0_13, %c0_14] : memref<8x8x128xbf16, #tpu.memory_space<vmem>>, vector<1x8x128xbf16>
    %40 = vector.shape_cast %39 : vector<1x8x128xbf16> to vector<8x128xbf16>
    %41 = arith.extf %40 : vector<8x128xbf16> to vector<8x128xf32>
    %cst_15 = arith.constant dense<0.000000e+00> : vector<8x128xf32>
    %42 = tpu.matmul %28, %3, %cst_15 {dimension_numbers = #tpu.dot_dimension_numbers<[1], [0], [0], [1], [0, 0, 1, 1], [], []>} : vector<8x32xf32>, vector<32x128xf32>, vector<8x128xf32> -> vector<8x128xf32>
    %43 = arith.addf %41, %42 : vector<8x128xf32>
    %44 = vector.extract_strided_slice %43 {offsets = [0, 0], sizes = [8, 96], strides = [1, 1]} : vector<8x128xf32> to vector<8x96xf32>
    %45 = arith.negf %44 : vector<8x96xf32>
    %46 = math.exp %45 : vector<8x96xf32>
    %cst_16 = arith.constant 1.000000e+00 : f32
    %47 = vector.broadcast %cst_16 : f32 to vector<8x96xf32>
    %48 = arith.addf %47, %46 : vector<8x96xf32>
    %49 = arith.divf %47, %48 : vector<8x96xf32>
    %50 = vector.extract_strided_slice %43 {offsets = [0, 96], sizes = [8, 32], strides = [1, 1]} : vector<8x128xf32> to vector<8x32xf32>
    %51 = math.tanh %50 : vector<8x32xf32>
    %52 = vector.extract_strided_slice %49 {offsets = [0, 0], sizes = [8, 32], strides = [1, 1]} : vector<8x96xf32> to vector<8x32xf32>
    %53 = vector.extract_strided_slice %49 {offsets = [0, 32], sizes = [8, 32], strides = [1, 1]} : vector<8x96xf32> to vector<8x32xf32>
    %54 = vector.extract_strided_slice %49 {offsets = [0, 64], sizes = [8, 32], strides = [1, 1]} : vector<8x96xf32> to vector<8x32xf32>
    %55 = arith.mulf %53, %26 : vector<8x32xf32>
    %56 = arith.mulf %52, %51 : vector<8x32xf32>
    %57 = arith.addf %55, %56 : vector<8x32xf32>
    %58 = math.tanh %57 : vector<8x32xf32>
    %59 = arith.mulf %54, %58 : vector<8x32xf32>
    %60 = arith.truncf %59 : vector<8x32xf32> to vector<8x32xbf16>
    %61 = arith.index_cast %c1_i32 : i32 to index
    %c0_17 = arith.constant 0 : index
    %c0_18 = arith.constant 0 : index
    %62 = vector.load %arg5[%61, %c0_17, %c0_18] : memref<8x8x32xbf16, #tpu.memory_space<vmem>>, vector<1x8x32xbf16>
    %63 = vector.shape_cast %62 : vector<1x8x32xbf16> to vector<8x32xbf16>
    %64 = vector.shape_cast %60 : vector<8x32xbf16> to vector<1x8x32xbf16>
    tpu.vector_store %arg5[%61, %c0_17, %c0_18], %64 {strides = array<i32>} : memref<8x8x32xbf16, #tpu.memory_space<vmem>>, vector<1x8x32xbf16>,
    %65 = arith.addi %4, %c1_i32 : i32
    %c7_i32_19 = arith.constant 7 : i32
    %66 = arith.cmpi eq, %65, %c7_i32_19 : i32
    %67 = arith.extui %66 : i1 to i32
    %c0_i32_20 = arith.constant 0 : i32
    %68 = arith.cmpi ne, %67, %c0_i32_20 : i32
    scf.if %68 {
      %c0_75 = arith.constant 0 : index
      %c0_76 = arith.constant 0 : index
      %257 = vector.load %arg6[%c0_75, %c0_76] : memref<8x32xf32, #tpu.memory_space<vmem>>, vector<8x32xf32>
      tpu.vector_store %arg6[%c0_75, %c0_76], %59 {strides = array<i32>} : memref<8x32xf32, #tpu.memory_space<vmem>>, vector<8x32xf32>,
      %c0_77 = arith.constant 0 : index
      %c0_78 = arith.constant 0 : index
      %258 = vector.load %arg7[%c0_77, %c0_78] : memref<8x32xf32, #tpu.memory_space<vmem>>, vector<8x32xf32>
      tpu.vector_store %arg7[%c0_77, %c0_78], %57 {strides = array<i32>} : memref<8x32xf32, #tpu.memory_space<vmem>>, vector<8x32xf32>,
    } else {
    }
    %c2_i32 = arith.constant 2 : i32
    %69 = arith.index_cast %c2_i32 : i32 to index
    %c0_21 = arith.constant 0 : index
    %c0_22 = arith.constant 0 : index
    %70 = vector.load %arg1[%69, %c0_21, %c0_22] : memref<8x8x128xbf16, #tpu.memory_space<vmem>>, vector<1x8x128xbf16>
    %71 = vector.shape_cast %70 : vector<1x8x128xbf16> to vector<8x128xbf16>
    %72 = arith.extf %71 : vector<8x128xbf16> to vector<8x128xf32>
    %cst_23 = arith.constant dense<0.000000e+00> : vector<8x128xf32>
    %73 = tpu.matmul %59, %3, %cst_23 {dimension_numbers = #tpu.dot_dimension_numbers<[1], [0], [0], [1], [0, 0, 1, 1], [], []>} : vector<8x32xf32>, vector<32x128xf32>, vector<8x128xf32> -> vector<8x128xf32>
    %74 = arith.addf %72, %73 : vector<8x128xf32>
    %75 = vector.extract_strided_slice %74 {offsets = [0, 0], sizes = [8, 96], strides = [1, 1]} : vector<8x128xf32> to vector<8x96xf32>
    %76 = arith.negf %75 : vector<8x96xf32>
    %77 = math.exp %76 : vector<8x96xf32>
    %cst_24 = arith.constant 1.000000e+00 : f32
    %78 = vector.broadcast %cst_24 : f32 to vector<8x96xf32>
    %79 = arith.addf %78, %77 : vector<8x96xf32>
    %80 = arith.divf %78, %79 : vector<8x96xf32>
    %81 = vector.extract_strided_slice %74 {offsets = [0, 96], sizes = [8, 32], strides = [1, 1]} : vector<8x128xf32> to vector<8x32xf32>
    %82 = math.tanh %81 : vector<8x32xf32>
    %83 = vector.extract_strided_slice %80 {offsets = [0, 0], sizes = [8, 32], strides = [1, 1]} : vector<8x96xf32> to vector<8x32xf32>
    %84 = vector.extract_strided_slice %80 {offsets = [0, 32], sizes = [8, 32], strides = [1, 1]} : vector<8x96xf32> to vector<8x32xf32>
    %85 = vector.extract_strided_slice %80 {offsets = [0, 64], sizes = [8, 32], strides = [1, 1]} : vector<8x96xf32> to vector<8x32xf32>
    %86 = arith.mulf %84, %57 : vector<8x32xf32>
    %87 = arith.mulf %83, %82 : vector<8x32xf32>
    %88 = arith.addf %86, %87 : vector<8x32xf32>
    %89 = math.tanh %88 : vector<8x32xf32>
    %90 = arith.mulf %85, %89 : vector<8x32xf32>
    %91 = arith.truncf %90 : vector<8x32xf32> to vector<8x32xbf16>
    %92 = arith.index_cast %c2_i32 : i32 to index
    %c0_25 = arith.constant 0 : index
    %c0_26 = arith.constant 0 : index
    %93 = vector.load %arg5[%92, %c0_25, %c0_26] : memref<8x8x32xbf16, #tpu.memory_space<vmem>>, vector<1x8x32xbf16>
    %94 = vector.shape_cast %93 : vector<1x8x32xbf16> to vector<8x32xbf16>
    %95 = vector.shape_cast %91 : vector<8x32xbf16> to vector<1x8x32xbf16>
    tpu.vector_store %arg5[%92, %c0_25, %c0_26], %95 {strides = array<i32>} : memref<8x8x32xbf16, #tpu.memory_space<vmem>>, vector<1x8x32xbf16>,
    %96 = arith.addi %4, %c2_i32 : i32
    %c7_i32_27 = arith.constant 7 : i32
    %97 = arith.cmpi eq, %96, %c7_i32_27 : i32
    %98 = arith.extui %97 : i1 to i32
    %c0_i32_28 = arith.constant 0 : i32
    %99 = arith.cmpi ne, %98, %c0_i32_28 : i32
    scf.if %99 {
      %c0_75 = arith.constant 0 : index
      %c0_76 = arith.constant 0 : index
      %257 = vector.load %arg6[%c0_75, %c0_76] : memref<8x32xf32, #tpu.memory_space<vmem>>, vector<8x32xf32>
      tpu.vector_store %arg6[%c0_75, %c0_76], %90 {strides = array<i32>} : memref<8x32xf32, #tpu.memory_space<vmem>>, vector<8x32xf32>,
      %c0_77 = arith.constant 0 : index
      %c0_78 = arith.constant 0 : index
      %258 = vector.load %arg7[%c0_77, %c0_78] : memref<8x32xf32, #tpu.memory_space<vmem>>, vector<8x32xf32>
      tpu.vector_store %arg7[%c0_77, %c0_78], %88 {strides = array<i32>} : memref<8x32xf32, #tpu.memory_space<vmem>>, vector<8x32xf32>,
    } else {
    }
    %c3_i32 = arith.constant 3 : i32
    %100 = arith.index_cast %c3_i32 : i32 to index
    %c0_29 = arith.constant 0 : index
    %c0_30 = arith.constant 0 : index
    %101 = vector.load %arg1[%100, %c0_29, %c0_30] : memref<8x8x128xbf16, #tpu.memory_space<vmem>>, vector<1x8x128xbf16>
    %102 = vector.shape_cast %101 : vector<1x8x128xbf16> to vector<8x128xbf16>
    %103 = arith.extf %102 : vector<8x128xbf16> to vector<8x128xf32>
    %cst_31 = arith.constant dense<0.000000e+00> : vector<8x128xf32>
    %104 = tpu.matmul %90, %3, %cst_31 {dimension_numbers = #tpu.dot_dimension_numbers<[1], [0], [0], [1], [0, 0, 1, 1], [], []>} : vector<8x32xf32>, vector<32x128xf32>, vector<8x128xf32> -> vector<8x128xf32>
    %105 = arith.addf %103, %104 : vector<8x128xf32>
    %106 = vector.extract_strided_slice %105 {offsets = [0, 0], sizes = [8, 96], strides = [1, 1]} : vector<8x128xf32> to vector<8x96xf32>
    %107 = arith.negf %106 : vector<8x96xf32>
    %108 = math.exp %107 : vector<8x96xf32>
    %cst_32 = arith.constant 1.000000e+00 : f32
    %109 = vector.broadcast %cst_32 : f32 to vector<8x96xf32>
    %110 = arith.addf %109, %108 : vector<8x96xf32>
    %111 = arith.divf %109, %110 : vector<8x96xf32>
    %112 = vector.extract_strided_slice %105 {offsets = [0, 96], sizes = [8, 32], strides = [1, 1]} : vector<8x128xf32> to vector<8x32xf32>
    %113 = math.tanh %112 : vector<8x32xf32>
    %114 = vector.extract_strided_slice %111 {offsets = [0, 0], sizes = [8, 32], strides = [1, 1]} : vector<8x96xf32> to vector<8x32xf32>
    %115 = vector.extract_strided_slice %111 {offsets = [0, 32], sizes = [8, 32], strides = [1, 1]} : vector<8x96xf32> to vector<8x32xf32>
    %116 = vector.extract_strided_slice %111 {offsets = [0, 64], sizes = [8, 32], strides = [1, 1]} : vector<8x96xf32> to vector<8x32xf32>
    %117 = arith.mulf %115, %88 : vector<8x32xf32>
    %118 = arith.mulf %114, %113 : vector<8x32xf32>
    %119 = arith.addf %117, %118 : vector<8x32xf32>
    %120 = math.tanh %119 : vector<8x32xf32>
    %121 = arith.mulf %116, %120 : vector<8x32xf32>
    %122 = arith.truncf %121 : vector<8x32xf32> to vector<8x32xbf16>
    %123 = arith.index_cast %c3_i32 : i32 to index
    %c0_33 = arith.constant 0 : index
    %c0_34 = arith.constant 0 : index
    %124 = vector.load %arg5[%123, %c0_33, %c0_34] : memref<8x8x32xbf16, #tpu.memory_space<vmem>>, vector<1x8x32xbf16>
    %125 = vector.shape_cast %124 : vector<1x8x32xbf16> to vector<8x32xbf16>
    %126 = vector.shape_cast %122 : vector<8x32xbf16> to vector<1x8x32xbf16>
    tpu.vector_store %arg5[%123, %c0_33, %c0_34], %126 {strides = array<i32>} : memref<8x8x32xbf16, #tpu.memory_space<vmem>>, vector<1x8x32xbf16>,
    %127 = arith.addi %4, %c3_i32 : i32
    %c7_i32_35 = arith.constant 7 : i32
    %128 = arith.cmpi eq, %127, %c7_i32_35 : i32
    %129 = arith.extui %128 : i1 to i32
    %c0_i32_36 = arith.constant 0 : i32
    %130 = arith.cmpi ne, %129, %c0_i32_36 : i32
    scf.if %130 {
      %c0_75 = arith.constant 0 : index
      %c0_76 = arith.constant 0 : index
      %257 = vector.load %arg6[%c0_75, %c0_76] : memref<8x32xf32, #tpu.memory_space<vmem>>, vector<8x32xf32>
      tpu.vector_store %arg6[%c0_75, %c0_76], %121 {strides = array<i32>} : memref<8x32xf32, #tpu.memory_space<vmem>>, vector<8x32xf32>,
      %c0_77 = arith.constant 0 : index
      %c0_78 = arith.constant 0 : index
      %258 = vector.load %arg7[%c0_77, %c0_78] : memref<8x32xf32, #tpu.memory_space<vmem>>, vector<8x32xf32>
      tpu.vector_store %arg7[%c0_77, %c0_78], %119 {strides = array<i32>} : memref<8x32xf32, #tpu.memory_space<vmem>>, vector<8x32xf32>,
    } else {
    }
    %c4_i32 = arith.constant 4 : i32
    %131 = arith.index_cast %c4_i32 : i32 to index
    %c0_37 = arith.constant 0 : index
    %c0_38 = arith.constant 0 : index
    %132 = vector.load %arg1[%131, %c0_37, %c0_38] : memref<8x8x128xbf16, #tpu.memory_space<vmem>>, vector<1x8x128xbf16>
    %133 = vector.shape_cast %132 : vector<1x8x128xbf16> to vector<8x128xbf16>
    %134 = arith.extf %133 : vector<8x128xbf16> to vector<8x128xf32>
    %cst_39 = arith.constant dense<0.000000e+00> : vector<8x128xf32>
    %135 = tpu.matmul %121, %3, %cst_39 {dimension_numbers = #tpu.dot_dimension_numbers<[1], [0], [0], [1], [0, 0, 1, 1], [], []>} : vector<8x32xf32>, vector<32x128xf32>, vector<8x128xf32> -> vector<8x128xf32>
    %136 = arith.addf %134, %135 : vector<8x128xf32>
    %137 = vector.extract_strided_slice %136 {offsets = [0, 0], sizes = [8, 96], strides = [1, 1]} : vector<8x128xf32> to vector<8x96xf32>
    %138 = arith.negf %137 : vector<8x96xf32>
    %139 = math.exp %138 : vector<8x96xf32>
    %cst_40 = arith.constant 1.000000e+00 : f32
    %140 = vector.broadcast %cst_40 : f32 to vector<8x96xf32>
    %141 = arith.addf %140, %139 : vector<8x96xf32>
    %142 = arith.divf %140, %141 : vector<8x96xf32>
    %143 = vector.extract_strided_slice %136 {offsets = [0, 96], sizes = [8, 32], strides = [1, 1]} : vector<8x128xf32> to vector<8x32xf32>
    %144 = math.tanh %143 : vector<8x32xf32>
    %145 = vector.extract_strided_slice %142 {offsets = [0, 0], sizes = [8, 32], strides = [1, 1]} : vector<8x96xf32> to vector<8x32xf32>
    %146 = vector.extract_strided_slice %142 {offsets = [0, 32], sizes = [8, 32], strides = [1, 1]} : vector<8x96xf32> to vector<8x32xf32>
    %147 = vector.extract_strided_slice %142 {offsets = [0, 64], sizes = [8, 32], strides = [1, 1]} : vector<8x96xf32> to vector<8x32xf32>
    %148 = arith.mulf %146, %119 : vector<8x32xf32>
    %149 = arith.mulf %145, %144 : vector<8x32xf32>
    %150 = arith.addf %148, %149 : vector<8x32xf32>
    %151 = math.tanh %150 : vector<8x32xf32>
    %152 = arith.mulf %147, %151 : vector<8x32xf32>
    %153 = arith.truncf %152 : vector<8x32xf32> to vector<8x32xbf16>
    %154 = arith.index_cast %c4_i32 : i32 to index
    %c0_41 = arith.constant 0 : index
    %c0_42 = arith.constant 0 : index
    %155 = vector.load %arg5[%154, %c0_41, %c0_42] : memref<8x8x32xbf16, #tpu.memory_space<vmem>>, vector<1x8x32xbf16>
    %156 = vector.shape_cast %155 : vector<1x8x32xbf16> to vector<8x32xbf16>
    %157 = vector.shape_cast %153 : vector<8x32xbf16> to vector<1x8x32xbf16>
    tpu.vector_store %arg5[%154, %c0_41, %c0_42], %157 {strides = array<i32>} : memref<8x8x32xbf16, #tpu.memory_space<vmem>>, vector<1x8x32xbf16>,
    %158 = arith.addi %4, %c4_i32 : i32
    %c7_i32_43 = arith.constant 7 : i32
    %159 = arith.cmpi eq, %158, %c7_i32_43 : i32
    %160 = arith.extui %159 : i1 to i32
    %c0_i32_44 = arith.constant 0 : i32
    %161 = arith.cmpi ne, %160, %c0_i32_44 : i32
    scf.if %161 {
      %c0_75 = arith.constant 0 : index
      %c0_76 = arith.constant 0 : index
      %257 = vector.load %arg6[%c0_75, %c0_76] : memref<8x32xf32, #tpu.memory_space<vmem>>, vector<8x32xf32>
      tpu.vector_store %arg6[%c0_75, %c0_76], %152 {strides = array<i32>} : memref<8x32xf32, #tpu.memory_space<vmem>>, vector<8x32xf32>,
      %c0_77 = arith.constant 0 : index
      %c0_78 = arith.constant 0 : index
      %258 = vector.load %arg7[%c0_77, %c0_78] : memref<8x32xf32, #tpu.memory_space<vmem>>, vector<8x32xf32>
      tpu.vector_store %arg7[%c0_77, %c0_78], %150 {strides = array<i32>} : memref<8x32xf32, #tpu.memory_space<vmem>>, vector<8x32xf32>,
    } else {
    }
    %c5_i32 = arith.constant 5 : i32
    %162 = arith.index_cast %c5_i32 : i32 to index
    %c0_45 = arith.constant 0 : index
    %c0_46 = arith.constant 0 : index
    %163 = vector.load %arg1[%162, %c0_45, %c0_46] : memref<8x8x128xbf16, #tpu.memory_space<vmem>>, vector<1x8x128xbf16>
    %164 = vector.shape_cast %163 : vector<1x8x128xbf16> to vector<8x128xbf16>
    %165 = arith.extf %164 : vector<8x128xbf16> to vector<8x128xf32>
    %cst_47 = arith.constant dense<0.000000e+00> : vector<8x128xf32>
    %166 = tpu.matmul %152, %3, %cst_47 {dimension_numbers = #tpu.dot_dimension_numbers<[1], [0], [0], [1], [0, 0, 1, 1], [], []>} : vector<8x32xf32>, vector<32x128xf32>, vector<8x128xf32> -> vector<8x128xf32>
    %167 = arith.addf %165, %166 : vector<8x128xf32>
    %168 = vector.extract_strided_slice %167 {offsets = [0, 0], sizes = [8, 96], strides = [1, 1]} : vector<8x128xf32> to vector<8x96xf32>
    %169 = arith.negf %168 : vector<8x96xf32>
    %170 = math.exp %169 : vector<8x96xf32>
    %cst_48 = arith.constant 1.000000e+00 : f32
    %171 = vector.broadcast %cst_48 : f32 to vector<8x96xf32>
    %172 = arith.addf %171, %170 : vector<8x96xf32>
    %173 = arith.divf %171, %172 : vector<8x96xf32>
    %174 = vector.extract_strided_slice %167 {offsets = [0, 96], sizes = [8, 32], strides = [1, 1]} : vector<8x128xf32> to vector<8x32xf32>
    %175 = math.tanh %174 : vector<8x32xf32>
    %176 = vector.extract_strided_slice %173 {offsets = [0, 0], sizes = [8, 32], strides = [1, 1]} : vector<8x96xf32> to vector<8x32xf32>
    %177 = vector.extract_strided_slice %173 {offsets = [0, 32], sizes = [8, 32], strides = [1, 1]} : vector<8x96xf32> to vector<8x32xf32>
    %178 = vector.extract_strided_slice %173 {offsets = [0, 64], sizes = [8, 32], strides = [1, 1]} : vector<8x96xf32> to vector<8x32xf32>
    %179 = arith.mulf %177, %150 : vector<8x32xf32>
    %180 = arith.mulf %176, %175 : vector<8x32xf32>
    %181 = arith.addf %179, %180 : vector<8x32xf32>
    %182 = math.tanh %181 : vector<8x32xf32>
    %183 = arith.mulf %178, %182 : vector<8x32xf32>
    %184 = arith.truncf %183 : vector<8x32xf32> to vector<8x32xbf16>
    %185 = arith.index_cast %c5_i32 : i32 to index
    %c0_49 = arith.constant 0 : index
    %c0_50 = arith.constant 0 : index
    %186 = vector.load %arg5[%185, %c0_49, %c0_50] : memref<8x8x32xbf16, #tpu.memory_space<vmem>>, vector<1x8x32xbf16>
    %187 = vector.shape_cast %186 : vector<1x8x32xbf16> to vector<8x32xbf16>
    %188 = vector.shape_cast %184 : vector<8x32xbf16> to vector<1x8x32xbf16>
    tpu.vector_store %arg5[%185, %c0_49, %c0_50], %188 {strides = array<i32>} : memref<8x8x32xbf16, #tpu.memory_space<vmem>>, vector<1x8x32xbf16>,
    %189 = arith.addi %4, %c5_i32 : i32
    %c7_i32_51 = arith.constant 7 : i32
    %190 = arith.cmpi eq, %189, %c7_i32_51 : i32
    %191 = arith.extui %190 : i1 to i32
    %c0_i32_52 = arith.constant 0 : i32
    %192 = arith.cmpi ne, %191, %c0_i32_52 : i32
    scf.if %192 {
      %c0_75 = arith.constant 0 : index
      %c0_76 = arith.constant 0 : index
      %257 = vector.load %arg6[%c0_75, %c0_76] : memref<8x32xf32, #tpu.memory_space<vmem>>, vector<8x32xf32>
      tpu.vector_store %arg6[%c0_75, %c0_76], %183 {strides = array<i32>} : memref<8x32xf32, #tpu.memory_space<vmem>>, vector<8x32xf32>,
      %c0_77 = arith.constant 0 : index
      %c0_78 = arith.constant 0 : index
      %258 = vector.load %arg7[%c0_77, %c0_78] : memref<8x32xf32, #tpu.memory_space<vmem>>, vector<8x32xf32>
      tpu.vector_store %arg7[%c0_77, %c0_78], %181 {strides = array<i32>} : memref<8x32xf32, #tpu.memory_space<vmem>>, vector<8x32xf32>,
    } else {
    }
    %c6_i32 = arith.constant 6 : i32
    %193 = arith.index_cast %c6_i32 : i32 to index
    %c0_53 = arith.constant 0 : index
    %c0_54 = arith.constant 0 : index
    %194 = vector.load %arg1[%193, %c0_53, %c0_54] : memref<8x8x128xbf16, #tpu.memory_space<vmem>>, vector<1x8x128xbf16>
    %195 = vector.shape_cast %194 : vector<1x8x128xbf16> to vector<8x128xbf16>
    %196 = arith.extf %195 : vector<8x128xbf16> to vector<8x128xf32>
    %cst_55 = arith.constant dense<0.000000e+00> : vector<8x128xf32>
    %197 = tpu.matmul %183, %3, %cst_55 {dimension_numbers = #tpu.dot_dimension_numbers<[1], [0], [0], [1], [0, 0, 1, 1], [], []>} : vector<8x32xf32>, vector<32x128xf32>, vector<8x128xf32> -> vector<8x128xf32>
    %198 = arith.addf %196, %197 : vector<8x128xf32>
    %199 = vector.extract_strided_slice %198 {offsets = [0, 0], sizes = [8, 96], strides = [1, 1]} : vector<8x128xf32> to vector<8x96xf32>
    %200 = arith.negf %199 : vector<8x96xf32>
    %201 = math.exp %200 : vector<8x96xf32>
    %cst_56 = arith.constant 1.000000e+00 : f32
    %202 = vector.broadcast %cst_56 : f32 to vector<8x96xf32>
    %203 = arith.addf %202, %201 : vector<8x96xf32>
    %204 = arith.divf %202, %203 : vector<8x96xf32>
    %205 = vector.extract_strided_slice %198 {offsets = [0, 96], sizes = [8, 32], strides = [1, 1]} : vector<8x128xf32> to vector<8x32xf32>
    %206 = math.tanh %205 : vector<8x32xf32>
    %207 = vector.extract_strided_slice %204 {offsets = [0, 0], sizes = [8, 32], strides = [1, 1]} : vector<8x96xf32> to vector<8x32xf32>
    %208 = vector.extract_strided_slice %204 {offsets = [0, 32], sizes = [8, 32], strides = [1, 1]} : vector<8x96xf32> to vector<8x32xf32>
    %209 = vector.extract_strided_slice %204 {offsets = [0, 64], sizes = [8, 32], strides = [1, 1]} : vector<8x96xf32> to vector<8x32xf32>
    %210 = arith.mulf %208, %181 : vector<8x32xf32>
    %211 = arith.mulf %207, %206 : vector<8x32xf32>
    %212 = arith.addf %210, %211 : vector<8x32xf32>
    %213 = math.tanh %212 : vector<8x32xf32>
    %214 = arith.mulf %209, %213 : vector<8x32xf32>
    %215 = arith.truncf %214 : vector<8x32xf32> to vector<8x32xbf16>
    %216 = arith.index_cast %c6_i32 : i32 to index
    %c0_57 = arith.constant 0 : index
    %c0_58 = arith.constant 0 : index
    %217 = vector.load %arg5[%216, %c0_57, %c0_58] : memref<8x8x32xbf16, #tpu.memory_space<vmem>>, vector<1x8x32xbf16>
    %218 = vector.shape_cast %217 : vector<1x8x32xbf16> to vector<8x32xbf16>
    %219 = vector.shape_cast %215 : vector<8x32xbf16> to vector<1x8x32xbf16>
    tpu.vector_store %arg5[%216, %c0_57, %c0_58], %219 {strides = array<i32>} : memref<8x8x32xbf16, #tpu.memory_space<vmem>>, vector<1x8x32xbf16>,
    %220 = arith.addi %4, %c6_i32 : i32
    %c7_i32_59 = arith.constant 7 : i32
    %221 = arith.cmpi eq, %220, %c7_i32_59 : i32
    %222 = arith.extui %221 : i1 to i32
    %c0_i32_60 = arith.constant 0 : i32
    %223 = arith.cmpi ne, %222, %c0_i32_60 : i32
    scf.if %223 {
      %c0_75 = arith.constant 0 : index
      %c0_76 = arith.constant 0 : index
      %257 = vector.load %arg6[%c0_75, %c0_76] : memref<8x32xf32, #tpu.memory_space<vmem>>, vector<8x32xf32>
      tpu.vector_store %arg6[%c0_75, %c0_76], %214 {strides = array<i32>} : memref<8x32xf32, #tpu.memory_space<vmem>>, vector<8x32xf32>,
      %c0_77 = arith.constant 0 : index
      %c0_78 = arith.constant 0 : index
      %258 = vector.load %arg7[%c0_77, %c0_78] : memref<8x32xf32, #tpu.memory_space<vmem>>, vector<8x32xf32>
      tpu.vector_store %arg7[%c0_77, %c0_78], %212 {strides = array<i32>} : memref<8x32xf32, #tpu.memory_space<vmem>>, vector<8x32xf32>,
    } else {
    }
    %c7_i32_61 = arith.constant 7 : i32
    %224 = arith.index_cast %c7_i32_61 : i32 to index
    %c0_62 = arith.constant 0 : index
    %c0_63 = arith.constant 0 : index
    %225 = vector.load %arg1[%224, %c0_62, %c0_63] : memref<8x8x128xbf16, #tpu.memory_space<vmem>>, vector<1x8x128xbf16>
    %226 = vector.shape_cast %225 : vector<1x8x128xbf16> to vector<8x128xbf16>
    %227 = arith.extf %226 : vector<8x128xbf16> to vector<8x128xf32>
    %cst_64 = arith.constant dense<0.000000e+00> : vector<8x128xf32>
    %228 = tpu.matmul %214, %3, %cst_64 {dimension_numbers = #tpu.dot_dimension_numbers<[1], [0], [0], [1], [0, 0, 1, 1], [], []>} : vector<8x32xf32>, vector<32x128xf32>, vector<8x128xf32> -> vector<8x128xf32>
    %229 = arith.addf %227, %228 : vector<8x128xf32>
    %230 = vector.extract_strided_slice %229 {offsets = [0, 0], sizes = [8, 96], strides = [1, 1]} : vector<8x128xf32> to vector<8x96xf32>
    %231 = arith.negf %230 : vector<8x96xf32>
    %232 = math.exp %231 : vector<8x96xf32>
    %cst_65 = arith.constant 1.000000e+00 : f32
    %233 = vector.broadcast %cst_65 : f32 to vector<8x96xf32>
    %234 = arith.addf %233, %232 : vector<8x96xf32>
    %235 = arith.divf %233, %234 : vector<8x96xf32>
    %236 = vector.extract_strided_slice %229 {offsets = [0, 96], sizes = [8, 32], strides = [1, 1]} : vector<8x128xf32> to vector<8x32xf32>
    %237 = math.tanh %236 : vector<8x32xf32>
    %238 = vector.extract_strided_slice %235 {offsets = [0, 0], sizes = [8, 32], strides = [1, 1]} : vector<8x96xf32> to vector<8x32xf32>
    %239 = vector.extract_strided_slice %235 {offsets = [0, 32], sizes = [8, 32], strides = [1, 1]} : vector<8x96xf32> to vector<8x32xf32>
    %240 = vector.extract_strided_slice %235 {offsets = [0, 64], sizes = [8, 32], strides = [1, 1]} : vector<8x96xf32> to vector<8x32xf32>
    %241 = arith.mulf %239, %212 : vector<8x32xf32>
    %242 = arith.mulf %238, %237 : vector<8x32xf32>
    %243 = arith.addf %241, %242 : vector<8x32xf32>
    %244 = math.tanh %243 : vector<8x32xf32>
    %245 = arith.mulf %240, %244 : vector<8x32xf32>
    %246 = arith.truncf %245 : vector<8x32xf32> to vector<8x32xbf16>
    %247 = arith.index_cast %c7_i32_61 : i32 to index
    %c0_66 = arith.constant 0 : index
    %c0_67 = arith.constant 0 : index
    %248 = vector.load %arg5[%247, %c0_66, %c0_67] : memref<8x8x32xbf16, #tpu.memory_space<vmem>>, vector<1x8x32xbf16>
    %249 = vector.shape_cast %248 : vector<1x8x32xbf16> to vector<8x32xbf16>
    %250 = vector.shape_cast %246 : vector<8x32xbf16> to vector<1x8x32xbf16>
    tpu.vector_store %arg5[%247, %c0_66, %c0_67], %250 {strides = array<i32>} : memref<8x8x32xbf16, #tpu.memory_space<vmem>>, vector<1x8x32xbf16>,
    %251 = arith.addi %4, %c7_i32_61 : i32
    %c7_i32_68 = arith.constant 7 : i32
    %252 = arith.cmpi eq, %251, %c7_i32_68 : i32
    %253 = arith.extui %252 : i1 to i32
    %c0_i32_69 = arith.constant 0 : i32
    %254 = arith.cmpi ne, %253, %c0_i32_69 : i32
    scf.if %254 {
      %c0_75 = arith.constant 0 : index
      %c0_76 = arith.constant 0 : index
      %257 = vector.load %arg6[%c0_75, %c0_76] : memref<8x32xf32, #tpu.memory_space<vmem>>, vector<8x32xf32>
      tpu.vector_store %arg6[%c0_75, %c0_76], %245 {strides = array<i32>} : memref<8x32xf32, #tpu.memory_space<vmem>>, vector<8x32xf32>,
      %c0_77 = arith.constant 0 : index
      %c0_78 = arith.constant 0 : index
      %258 = vector.load %arg7[%c0_77, %c0_78] : memref<8x32xf32, #tpu.memory_space<vmem>>, vector<8x32xf32>
      tpu.vector_store %arg7[%c0_77, %c0_78], %243 {strides = array<i32>} : memref<8x32xf32, #tpu.memory_space<vmem>>, vector<8x32xf32>,
    } else {
    }
    %c8_i32_70 = arith.constant 8 : i32
    %c0_71 = arith.constant 0 : index
    %c0_72 = arith.constant 0 : index
    %255 = vector.load %arg8[%c0_71, %c0_72] : memref<8x32xf32, #tpu.memory_space<vmem>>, vector<8x32xf32>
    tpu.vector_store %arg8[%c0_71, %c0_72], %245 {strides = array<i32>} : memref<8x32xf32, #tpu.memory_space<vmem>>, vector<8x32xf32>,
    %c0_73 = arith.constant 0 : index
    %c0_74 = arith.constant 0 : index
    %256 = vector.load %arg9[%c0_73, %c0_74] : memref<8x32xf32, #tpu.memory_space<vmem>>, vector<8x32xf32>
    tpu.vector_store %arg9[%c0_73, %c0_74], %243 {strides = array<i32>} : memref<8x32xf32, #tpu.memory_space<vmem>>, vector<8x32xf32>,
    return
  }
  func.func @transform_0(%arg0: i32) -> (i32, i32, i32) {
    %c0_i32 = arith.constant 0 : i32
    %c0_i32_0 = arith.constant 0 : i32
    %c0_i32_1 = arith.constant 0 : i32
    return %arg0, %c0_i32, %c0_i32_0 : i32, i32, i32
  }
  func.func @transform_1(%arg0: i32) -> (i32, i32) {
    %c0_i32 = arith.constant 0 : i32
    %c0_i32_0 = arith.constant 0 : i32
    %c0_i32_1 = arith.constant 0 : i32
    return %c0_i32, %c0_i32_0 : i32, i32
  }
  func.func @transform_2(%arg0: i32) -> (i32, i32) {
    %c0_i32 = arith.constant 0 : i32
    %c0_i32_0 = arith.constant 0 : i32
    %c0_i32_1 = arith.constant 0 : i32
    return %c0_i32, %c0_i32_0 : i32, i32
  }
  func.func @transform_3(%arg0: i32) -> (i32, i32) {
    %c0_i32 = arith.constant 0 : i32
    %c0_i32_0 = arith.constant 0 : i32
    %c0_i32_1 = arith.constant 0 : i32
    return %c0_i32, %c0_i32_0 : i32, i32
  }
  func.func @transform_4(%arg0: i32) -> (i32, i32, i32) {
    %c0_i32 = arith.constant 0 : i32
    %c0_i32_0 = arith.constant 0 : i32
    %c0_i32_1 = arith.constant 0 : i32
    return %arg0, %c0_i32, %c0_i32_0 : i32, i32, i32
  }
  func.func @transform_5(%arg0: i32) -> (i32, i32) {
    %c0_i32 = arith.constant 0 : i32
    %c0_i32_0 = arith.constant 0 : i32
    %c0_i32_1 = arith.constant 0 : i32
    return %c0_i32, %c0_i32_0 : i32, i32
  }
  func.func @transform_6(%arg0: i32) -> (i32, i32) {
    %c0_i32 = arith.constant 0 : i32
    %c0_i32_0 = arith.constant 0 : i32
    %c0_i32_1 = arith.constant 0 : i32
    return %c0_i32, %c0_i32_0 : i32, i32
  }
}

module attributes {stable_mosaic.version = 11 : i64} {
  func.func @_linear_kernel(%arg0: i32, %arg1: memref<64x8xbf16, #tpu.memory_space<vmem>>, %arg2: memref<8x128xbf16, #tpu.memory_space<vmem>>, %arg3: memref<1x128xf32, #tpu.memory_space<vmem>>, %arg4: memref<64x128xbf16, #tpu.memory_space<vmem>>) attributes {dimension_semantics = [#tpu.dimension_semantics<parallel>], iteration_bounds = array<i64: 1>, scalar_prefetch = 0 : i64, scratch_operands = 0 : i64, tpu.core_type = #tpu.core_type<tc>, window_params = [{transform_indices = @transform_0, window_bounds = array<i64: 64, 8>}, {pipeline_mode = #tpu.pipeline_mode<synchronous>, transform_indices = @transform_1, window_bounds = array<i64: 8, 128>}, {pipeline_mode = #tpu.pipeline_mode<synchronous>, transform_indices = @transform_2, window_bounds = array<i64: 1, 128>}, {transform_indices = @transform_3, window_bounds = array<i64: 64, 128>}]} {
    %c0 = arith.constant 0 : index
    %c0_0 = arith.constant 0 : index
    %0 = vector.load %arg1[%c0, %c0_0] : memref<64x8xbf16, #tpu.memory_space<vmem>>, vector<64x8xbf16>
    %c0_1 = arith.constant 0 : index
    %c0_2 = arith.constant 0 : index
    %1 = vector.load %arg2[%c0_1, %c0_2] : memref<8x128xbf16, #tpu.memory_space<vmem>>, vector<8x128xbf16>
    %cst = arith.constant dense<0.000000e+00> : vector<64x128xf32>
    %2 = tpu.matmul %0, %1, %cst {dimension_numbers = #tpu.dot_dimension_numbers<[1], [0], [0], [1], [0, 0, 1, 1], [], []>} : vector<64x8xbf16>, vector<8x128xbf16>, vector<64x128xf32> -> vector<64x128xf32>
    %c0_3 = arith.constant 0 : index
    %c0_4 = arith.constant 0 : index
    %3 = vector.load %arg3[%c0_3, %c0_4] : memref<1x128xf32, #tpu.memory_space<vmem>>, vector<1x128xf32>
    %4 = vector.broadcast %3 : vector<1x128xf32> to vector<64x128xf32>
    %5 = arith.addf %2, %4 : vector<64x128xf32>
    %6 = arith.truncf %5 : vector<64x128xf32> to vector<64x128xbf16>
    %c0_5 = arith.constant 0 : index
    %c0_6 = arith.constant 0 : index
    %7 = vector.load %arg4[%c0_5, %c0_6] : memref<64x128xbf16, #tpu.memory_space<vmem>>, vector<64x128xbf16>
    tpu.vector_store %arg4[%c0_5, %c0_6], %6 {strides = array<i32>} : memref<64x128xbf16, #tpu.memory_space<vmem>>, vector<64x128xbf16>,
    return
  }
  func.func @transform_0(%arg0: i32) -> (i32, i32) {
    %c0_i32 = arith.constant 0 : i32
    %c0_i32_0 = arith.constant 0 : i32
    return %arg0, %c0_i32 : i32, i32
  }
  func.func @transform_1(%arg0: i32) -> (i32, i32) {
    %c0_i32 = arith.constant 0 : i32
    %c0_i32_0 = arith.constant 0 : i32
    %c0_i32_1 = arith.constant 0 : i32
    return %c0_i32, %c0_i32_0 : i32, i32
  }
  func.func @transform_2(%arg0: i32) -> (i32, i32) {
    %c0_i32 = arith.constant 0 : i32
    %c0_i32_0 = arith.constant 0 : i32
    %c0_i32_1 = arith.constant 0 : i32
    return %c0_i32, %c0_i32_0 : i32, i32
  }
  func.func @transform_3(%arg0: i32) -> (i32, i32) {
    %c0_i32 = arith.constant 0 : i32
    %c0_i32_0 = arith.constant 0 : i32
    return %arg0, %c0_i32 : i32, i32
  }
}

module attributes {stable_mosaic.version = 11 : i64} {
  func.func @_decode_fused_add_kernel(%arg0: i32, %arg1: memref<16x32xbf16, #tpu.memory_space<vmem>>, %arg2: memref<16x32xbf16, #tpu.memory_space<vmem>>, %arg3: memref<32x128xbf16, #tpu.memory_space<vmem>>, %arg4: memref<1x128xf32, #tpu.memory_space<vmem>>, %arg5: memref<16x128xf32, #tpu.memory_space<vmem>>) attributes {dimension_semantics = [#tpu.dimension_semantics<parallel>], iteration_bounds = array<i64: 1>, scalar_prefetch = 0 : i64, scratch_operands = 0 : i64, tpu.core_type = #tpu.core_type<tc>, window_params = [{transform_indices = @transform_0, window_bounds = array<i64: 16, 32>}, {transform_indices = @transform_1, window_bounds = array<i64: 16, 32>}, {pipeline_mode = #tpu.pipeline_mode<synchronous>, transform_indices = @transform_2, window_bounds = array<i64: 32, 128>}, {pipeline_mode = #tpu.pipeline_mode<synchronous>, transform_indices = @transform_3, window_bounds = array<i64: 1, 128>}, {transform_indices = @transform_4, window_bounds = array<i64: 16, 128>}]} {
    %c0 = arith.constant 0 : index
    %c0_0 = arith.constant 0 : index
    %0 = vector.load %arg1[%c0, %c0_0] : memref<16x32xbf16, #tpu.memory_space<vmem>>, vector<16x32xbf16>
    %1 = arith.extf %0 : vector<16x32xbf16> to vector<16x32xf32>
    %c0_1 = arith.constant 0 : index
    %c0_2 = arith.constant 0 : index
    %2 = vector.load %arg2[%c0_1, %c0_2] : memref<16x32xbf16, #tpu.memory_space<vmem>>, vector<16x32xbf16>
    %3 = arith.extf %2 : vector<16x32xbf16> to vector<16x32xf32>
    %4 = arith.addf %1, %3 : vector<16x32xf32>
    %5 = arith.truncf %4 : vector<16x32xf32> to vector<16x32xbf16>
    %c0_3 = arith.constant 0 : index
    %c0_4 = arith.constant 0 : index
    %6 = vector.load %arg3[%c0_3, %c0_4] : memref<32x128xbf16, #tpu.memory_space<vmem>>, vector<32x128xbf16>
    %cst = arith.constant dense<0.000000e+00> : vector<16x128xf32>
    %7 = tpu.matmul %5, %6, %cst {dimension_numbers = #tpu.dot_dimension_numbers<[1], [0], [0], [1], [0, 0, 1, 1], [], []>} : vector<16x32xbf16>, vector<32x128xbf16>, vector<16x128xf32> -> vector<16x128xf32>
    %c0_5 = arith.constant 0 : index
    %c0_6 = arith.constant 0 : index
    %8 = vector.load %arg4[%c0_5, %c0_6] : memref<1x128xf32, #tpu.memory_space<vmem>>, vector<1x128xf32>
    %9 = vector.broadcast %8 : vector<1x128xf32> to vector<16x128xf32>
    %10 = arith.addf %7, %9 : vector<16x128xf32>
    %cst_7 = arith.constant dense<0xFF800000> : vector<16xf32>
    %11 = vector.multi_reduction <maximumf>, %10, %cst_7 [1] : vector<16x128xf32> to vector<16xf32>
    %12 = vector.shape_cast %11 : vector<16xf32> to vector<16x1xf32>
    %13 = vector.broadcast %12 : vector<16x1xf32> to vector<16x128xf32>
    %14 = arith.subf %10, %13 : vector<16x128xf32>
    %15 = math.exp %14 : vector<16x128xf32>
    %cst_8 = arith.constant dense<0.000000e+00> : vector<16xf32>
    %16 = vector.multi_reduction <add>, %15, %cst_8 [1] : vector<16x128xf32> to vector<16xf32>
    %17 = vector.shape_cast %16 : vector<16xf32> to vector<16x1xf32>
    %18 = math.log %17 : vector<16x1xf32>
    %19 = vector.broadcast %18 : vector<16x1xf32> to vector<16x128xf32>
    %20 = arith.subf %14, %19 : vector<16x128xf32>
    %c0_9 = arith.constant 0 : index
    %c0_10 = arith.constant 0 : index
    %21 = vector.load %arg5[%c0_9, %c0_10] : memref<16x128xf32, #tpu.memory_space<vmem>>, vector<16x128xf32>
    tpu.vector_store %arg5[%c0_9, %c0_10], %20 {strides = array<i32>} : memref<16x128xf32, #tpu.memory_space<vmem>>, vector<16x128xf32>,
    return
  }
  func.func @transform_0(%arg0: i32) -> (i32, i32) {
    %c0_i32 = arith.constant 0 : i32
    %c0_i32_0 = arith.constant 0 : i32
    return %arg0, %c0_i32 : i32, i32
  }
  func.func @transform_1(%arg0: i32) -> (i32, i32) {
    %c0_i32 = arith.constant 0 : i32
    %c0_i32_0 = arith.constant 0 : i32
    return %arg0, %c0_i32 : i32, i32
  }
  func.func @transform_2(%arg0: i32) -> (i32, i32) {
    %c0_i32 = arith.constant 0 : i32
    %c0_i32_0 = arith.constant 0 : i32
    %c0_i32_1 = arith.constant 0 : i32
    return %c0_i32, %c0_i32_0 : i32, i32
  }
  func.func @transform_3(%arg0: i32) -> (i32, i32) {
    %c0_i32 = arith.constant 0 : i32
    %c0_i32_0 = arith.constant 0 : i32
    %c0_i32_1 = arith.constant 0 : i32
    return %c0_i32, %c0_i32_0 : i32, i32
  }
  func.func @transform_4(%arg0: i32) -> (i32, i32) {
    %c0_i32 = arith.constant 0 : i32
    %c0_i32_0 = arith.constant 0 : i32
    return %arg0, %c0_i32 : i32, i32
  }
}

module attributes {stable_mosaic.version = 11 : i64} {
  func.func @_decode_kernel(%arg0: i32, %arg1: memref<16x32xbf16, #tpu.memory_space<vmem>>, %arg2: memref<32x128xbf16, #tpu.memory_space<vmem>>, %arg3: memref<1x128xf32, #tpu.memory_space<vmem>>, %arg4: memref<16x128xf32, #tpu.memory_space<vmem>>) attributes {dimension_semantics = [#tpu.dimension_semantics<parallel>], iteration_bounds = array<i64: 1>, scalar_prefetch = 0 : i64, scratch_operands = 0 : i64, tpu.core_type = #tpu.core_type<tc>, window_params = [{transform_indices = @transform_0, window_bounds = array<i64: 16, 32>}, {pipeline_mode = #tpu.pipeline_mode<synchronous>, transform_indices = @transform_1, window_bounds = array<i64: 32, 128>}, {pipeline_mode = #tpu.pipeline_mode<synchronous>, transform_indices = @transform_2, window_bounds = array<i64: 1, 128>}, {transform_indices = @transform_3, window_bounds = array<i64: 16, 128>}]} {
    %c0 = arith.constant 0 : index
    %c0_0 = arith.constant 0 : index
    %0 = vector.load %arg1[%c0, %c0_0] : memref<16x32xbf16, #tpu.memory_space<vmem>>, vector<16x32xbf16>
    %c0_1 = arith.constant 0 : index
    %c0_2 = arith.constant 0 : index
    %1 = vector.load %arg2[%c0_1, %c0_2] : memref<32x128xbf16, #tpu.memory_space<vmem>>, vector<32x128xbf16>
    %cst = arith.constant dense<0.000000e+00> : vector<16x128xf32>
    %2 = tpu.matmul %0, %1, %cst {dimension_numbers = #tpu.dot_dimension_numbers<[1], [0], [0], [1], [0, 0, 1, 1], [], []>} : vector<16x32xbf16>, vector<32x128xbf16>, vector<16x128xf32> -> vector<16x128xf32>
    %c0_3 = arith.constant 0 : index
    %c0_4 = arith.constant 0 : index
    %3 = vector.load %arg3[%c0_3, %c0_4] : memref<1x128xf32, #tpu.memory_space<vmem>>, vector<1x128xf32>
    %4 = vector.broadcast %3 : vector<1x128xf32> to vector<16x128xf32>
    %5 = arith.addf %2, %4 : vector<16x128xf32>
    %cst_5 = arith.constant dense<0xFF800000> : vector<16xf32>
    %6 = vector.multi_reduction <maximumf>, %5, %cst_5 [1] : vector<16x128xf32> to vector<16xf32>
    %7 = vector.shape_cast %6 : vector<16xf32> to vector<16x1xf32>
    %8 = vector.broadcast %7 : vector<16x1xf32> to vector<16x128xf32>
    %9 = arith.subf %5, %8 : vector<16x128xf32>
    %10 = math.exp %9 : vector<16x128xf32>
    %cst_6 = arith.constant dense<0.000000e+00> : vector<16xf32>
    %11 = vector.multi_reduction <add>, %10, %cst_6 [1] : vector<16x128xf32> to vector<16xf32>
    %12 = vector.shape_cast %11 : vector<16xf32> to vector<16x1xf32>
    %13 = math.log %12 : vector<16x1xf32>
    %14 = vector.broadcast %13 : vector<16x1xf32> to vector<16x128xf32>
    %15 = arith.subf %9, %14 : vector<16x128xf32>
    %c0_7 = arith.constant 0 : index
    %c0_8 = arith.constant 0 : index
    %16 = vector.load %arg4[%c0_7, %c0_8] : memref<16x128xf32, #tpu.memory_space<vmem>>, vector<16x128xf32>
    tpu.vector_store %arg4[%c0_7, %c0_8], %15 {strides = array<i32>} : memref<16x128xf32, #tpu.memory_space<vmem>>, vector<16x128xf32>,
    return
  }
  func.func @transform_0(%arg0: i32) -> (i32, i32) {
    %c0_i32 = arith.constant 0 : i32
    %c0_i32_0 = arith.constant 0 : i32
    return %arg0, %c0_i32 : i32, i32
  }
  func.func @transform_1(%arg0: i32) -> (i32, i32) {
    %c0_i32 = arith.constant 0 : i32
    %c0_i32_0 = arith.constant 0 : i32
    %c0_i32_1 = arith.constant 0 : i32
    return %c0_i32, %c0_i32_0 : i32, i32
  }
  func.func @transform_2(%arg0: i32) -> (i32, i32) {
    %c0_i32 = arith.constant 0 : i32
    %c0_i32_0 = arith.constant 0 : i32
    %c0_i32_1 = arith.constant 0 : i32
    return %c0_i32, %c0_i32_0 : i32, i32
  }
  func.func @transform_3(%arg0: i32) -> (i32, i32) {
    %c0_i32 = arith.constant 0 : i32
    %c0_i32_0 = arith.constant 0 : i32
    return %arg0, %c0_i32 : i32, i32
  }
}

</mosaic_0001>

<llo_original>
// kernel: rnn_model_forward.12
$region0: #{rnn_model_forward.12}
  #allocation0 [shape = 'u32[]', space=smem, size = 0x4, offset = 0x4, fixed_abs, tag = 'smem constant byte address 0x4 - core index']
  #allocation1 [shape = 'u32[144,128]{1,0:T(1,128)}', space=vmem, size = 0x12000, scoped, tag = 'internal scratch']
  %s0 = inlined_call_operand.vmem [shape: bf16[64,8], index: 0, kind: input, shape index: {}]
  %s1 = inlined_call_operand.vmem [shape: bf16[8,128], index: 1, kind: input, shape index: {}]
  %s2 = inlined_call_operand.vmem [shape: f32[1,128], index: 2, kind: input, shape index: {}]
  %s3 = inlined_call_operand.vmem [shape: bf16[64,128], index: 3, kind: output, shape index: {}]
  %s4 = sld [smem:[#allocation0]]
  $region22: #{rnn_model_forward.12} parent=0
    _
  %s6 = ssub.s32 1, %s4
  %s7 = scalar_select 0, %s6, %s4
  // Predicated region
  $region2: #{rnn_model_forward.12} parent=0 // pred_check
    _
  $region3: #{rnn_model_forward.12} parent=0 // pred_check_branch
    %9 = sbr.rel (0) target = $region5
  $region4: #{rnn_model_forward.12} parent=0 // pred_region
    _
  $region5: #{rnn_model_forward.12} parent=0 // pred_fallthru
    _
  // Predicated region
  $region6: #{rnn_model_forward.12} parent=0 // pred_check
    _
  $region7: #{rnn_model_forward.12} parent=0 // pred_check_branch
    %11 = sbr.rel (0) target = $region9
  $region8: #{rnn_model_forward.12} parent=0 // pred_region
    _
  $region9: #{rnn_model_forward.12} parent=0 // pred_fallthru
    _
  // Predicated region
  $region10: #{rnn_model_forward.12} parent=0 // pred_check
    _
  $region11: #{rnn_model_forward.12} parent=0 // pred_check_branch
    %13 = sbr.rel (0) target = $region13
  $region12: #{rnn_model_forward.12} parent=0 // pred_region
    _
  $region13: #{rnn_model_forward.12} parent=0 // pred_fallthru
    _
  %v15 = vld [vmem:[%s0] sm:$0xf]
  %v16 = vld [vmem:[%s0 + $0x4] sm:$0xf]
  %v17 = vld [vmem:[%s0 + $0x8] sm:$0xf]
  %v18 = vld [vmem:[%s0 + $0xc] sm:$0xf]
  %v19 = vld [vmem:[%s0 + $0x10] sm:$0xf]
  %v20 = vld [vmem:[%s0 + $0x14] sm:$0xf]
  %v21 = vld [vmem:[%s0 + $0x18] sm:$0xf]
  %v22 = vld [vmem:[%s0 + $0x1c] sm:$0xf]
  %v23 = vld [vmem:[%s1] sm:$0xf]
  %v24 = vld [vmem:[%s2] sm:$0x1]
  %v26 = vlaneseq
  %v27 = vshrl.u32 %v26, 7
  %v28 = vsub.s32 0, %v27
  %v29 = vrot.slane %v24, %v28
  %v39 = vunpack.c.l.b16 %v15
  %v40 = vunpack.c.l.b16 %v16
  %v41 = vunpack.c.l.b16 %v17
  %v42 = vunpack.c.l.b16 %v18
  %v43 = vunpack.c.l.b16 %v19
  %v44 = vunpack.c.l.b16 %v20
  %v45 = vunpack.c.l.b16 %v21
  %v46 = vunpack.c.l.b16 %v22
  %v47 = vpack.c.b16 %v40, %v39
  %v48 = vpack.c.b16 %v42, %v41
  %v49 = vpack.c.b16 %v44, %v43
  %v50 = vpack.c.b16 %v46, %v45
  %vm51 = vcmask 64512
  %v53 = vsel %vm51, %v47, 0
  %v56 = vsel %vm51, %v48, 0
  %v59 = vsel %vm51, %v49, 0
  %v62 = vsel %vm51, %v50, 0
  %vm64 = vcmask 1043456
  %v66 = vsel %vm64, %v23, 0
  %68 = vmatprep.subr.bf16.mxu0 0
  %69 = vmatpush1.bf16.msra.mxu0 %v66
  %70 = vmatprep.subr.bf16.mxu0 0
  %71 = vmatpush1.bf16.msra.mxu0 0
  %72 = vmatprep.subr.bf16.mxu0 0
  %73 = vmatpush1.bf16.msra.mxu0 0
  %74 = vmatprep.subr.bf16.mxu0 0
  %75 = vmatpush1.bf16.msra.mxu0 0
  %76 = vmatprep.subr.bf16.mxu0 0
  %77 = vmatpush1.bf16.msra.mxu0 0
  %78 = vmatprep.subr.bf16.mxu0 0
  %79 = vmatpush1.bf16.msra.mxu0 0
  %80 = vmatprep.subr.bf16.mxu0 0
  %81 = vmatpush1.bf16.msra.mxu0 0
  %82 = vmatprep.subr.bf16.mxu0 0
  %83 = vmatpush1.bf16.msra.mxu0 0
  %84 = vmatprep.subr.bf16.mxu0 0
  %85 = vmatpush1.bf16.msra.mxu0 0
  %86 = vmatprep.subr.bf16.mxu0 0
  %87 = vmatpush1.bf16.msra.mxu0 0
  %88 = vmatprep.subr.bf16.mxu0 0
  %89 = vmatpush1.bf16.msra.mxu0 0
  %90 = vmatprep.subr.bf16.mxu0 0
  %91 = vmatpush1.bf16.msra.mxu0 0
  %92 = vmatprep.subr.bf16.mxu0 0
  %93 = vmatpush1.bf16.msra.mxu0 0
  %94 = vmatprep.subr.bf16.mxu0 0
  %95 = vmatpush1.bf16.msra.mxu0 0
  %96 = vmatprep.subr.bf16.mxu0 0
  %97 = vmatpush1.bf16.msra.mxu0 0
  %98 = vmatprep.subr.bf16.mxu0 0
  %99 = vmatpush1.bf16.msra.mxu0 0
  %100 = vmatprep.mubr.bf16.mxu0 0
  %101 = vmatmul.mubr.bf16.gmra.mrb[0].mxu0 %v53
  %v102 = vpop.f32.mrb[0].mxu0
  %v103 = vadd.f32 %v29, %v102
  %v104 = vpop.f32.mrb[0].mxu0
  %v105 = vpop.f32.mrb[0].mxu0
  %v106 = vadd.f32 %v29, %v105
  %v107 = vpop.f32.mrb[0].mxu0
  %108 = vmatprep.mubr.bf16.mxu0 0
  %109 = vmatmul.mubr.bf16.gmra.mrb[0].mxu0 %v56
  %v110 = vpop.f32.mrb[0].mxu0
  %v111 = vadd.f32 %v29, %v110
  %v112 = vpop.f32.mrb[0].mxu0
  %v113 = vpop.f32.mrb[0].mxu0
  %v114 = vadd.f32 %v29, %v113
  %v115 = vpop.f32.mrb[0].mxu0
  %116 = vmatprep.mubr.bf16.mxu0 0
  %117 = vmatmul.mubr.bf16.gmra.mrb[0].mxu0 %v59
  %v118 = vpop.f32.mrb[0].mxu0
  %v119 = vadd.f32 %v29, %v118
  %v120 = vpop.f32.mrb[0].mxu0
  %v121 = vpop.f32.mrb[0].mxu0
  %v122 = vadd.f32 %v29, %v121
  %v123 = vpop.f32.mrb[0].mxu0
  %124 = vmatprep.mubr.bf16.mxu0 0
  %125 = vmatmul.mubr.bf16.gmra.mrb[0].mxu0 %v62
  %v126 = vpop.f32.mrb[0].mxu0
  %v127 = vadd.f32 %v29, %v126
  %v128 = vpop.f32.mrb[0].mxu0
  %v129 = vpop.f32.mrb[0].mxu0
  %v130 = vadd.f32 %v29, %v129
  %v131 = vpop.f32.mrb[0].mxu0
  %132 = vdwg.mxu0
  %v133 = vpack.c.bf16 %v106, %v103
  %v134 = vpack.c.bf16 %v114, %v111
  %v135 = vpack.c.bf16 %v122, %v119
  %v136 = vpack.c.bf16 %v130, %v127
  %v141 = vunpack.c.l.b16 %v133
  %v142 = vunpack.c.h.b16 %v133
  %v143 = vunpack.c.l.b16 %v134
  %v144 = vunpack.c.h.b16 %v134
  %v145 = vunpack.c.l.b16 %v135
  %v146 = vunpack.c.h.b16 %v135
  %v147 = vunpack.c.l.b16 %v136
  %v148 = vunpack.c.h.b16 %v136
  %v149 = vpack.c.b16 %v141, %v141
  %v150 = vpack.c.b16 %v142, %v142
  %v151 = vpack.c.b16 %v143, %v143
  %v152 = vpack.c.b16 %v144, %v144
  %v153 = vpack.c.b16 %v145, %v145
  %v154 = vpack.c.b16 %v146, %v146
  %v155 = vpack.c.b16 %v147, %v147
  %v156 = vpack.c.b16 %v148, %v148
  %165 = vst [vmem:[%s3] sm:$0xf] %v149
  %166 = vst [vmem:[%s3 + $0x4] sm:$0xf] %v150
  %167 = vst [vmem:[%s3 + $0x8] sm:$0xf] %v151
  %168 = vst [vmem:[%s3 + $0xc] sm:$0xf] %v152
  %169 = vst [vmem:[%s3 + $0x10] sm:$0xf] %v153
  %170 = vst [vmem:[%s3 + $0x14] sm:$0xf] %v154
  %171 = vst [vmem:[%s3 + $0x18] sm:$0xf] %v155
  %172 = vst [vmem:[%s3 + $0x1c] sm:$0xf] %v156
  // Predicated region
  $region14: #{rnn_model_forward.12} parent=0 // pred_check
    _
  $region15: #{rnn_model_forward.12} parent=0 // pred_check_branch
    %174 = sbr.rel (0) target = $region17
  $region16: #{rnn_model_forward.12} parent=0 // pred_region
    _
  $region17: #{rnn_model_forward.12} parent=0 // pred_fallthru
    _
  // Predicated region
  $region18: #{rnn_model_forward.12} parent=0 // pred_check
    _
  $region19: #{rnn_model_forward.12} parent=0 // pred_check_branch
    %176 = sbr.rel (0) target = $region21
  $region20: #{rnn_model_forward.12} parent=0 // pred_region
    _
  $region21: #{rnn_model_forward.12} parent=0 // pred_fallthru
    _

// kernel: rnn_model_forward.8
$region0: #{rnn_model_forward.8}
  #allocation0 [shape = 'u32[]', space=smem, size = 0x4, offset = 0x4, fixed_abs, tag = 'smem constant byte address 0x4 - core index']
  #allocation1 [shape = 'u32[144,128]{1,0:T(1,128)}', space=vmem, size = 0x12000, scoped, tag = 'internal scratch']
  %s0 = inlined_call_operand.vmem [shape: bf16[64,32], index: 0, kind: input, shape index: {}]
  %s1 = inlined_call_operand.vmem [shape: bf16[32,128], index: 1, kind: input, shape index: {}]
  %s2 = inlined_call_operand.vmem [shape: f32[1,128], index: 2, kind: input, shape index: {}]
  %s3 = inlined_call_operand.vmem [shape: bf16[64,128], index: 3, kind: output, shape index: {}]
  %s4 = sld [smem:[#allocation0]]
  $region22: #{rnn_model_forward.8} parent=0
    _
  %s6 = ssub.s32 1, %s4
  %s7 = scalar_select 0, %s6, %s4
  // Predicated region
  $region2: #{rnn_model_forward.8} parent=0 // pred_check
    _
  $region3: #{rnn_model_forward.8} parent=0 // pred_check_branch
    %9 = sbr.rel (0) target = $region5
  $region4: #{rnn_model_forward.8} parent=0 // pred_region
    _
  $region5: #{rnn_model_forward.8} parent=0 // pred_fallthru
    _
  // Predicated region
  $region6: #{rnn_model_forward.8} parent=0 // pred_check
    _
  $region7: #{rnn_model_forward.8} parent=0 // pred_check_branch
    %11 = sbr.rel (0) target = $region9
  $region8: #{rnn_model_forward.8} parent=0 // pred_region
    _
  $region9: #{rnn_model_forward.8} parent=0 // pred_fallthru
    _
  // Predicated region
  $region10: #{rnn_model_forward.8} parent=0 // pred_check
    _
  $region11: #{rnn_model_forward.8} parent=0 // pred_check_branch
    %13 = sbr.rel (0) target = $region13
  $region12: #{rnn_model_forward.8} parent=0 // pred_region
    _
  $region13: #{rnn_model_forward.8} parent=0 // pred_fallthru
    _
  %v15 = vld [vmem:[%s0] sm:$0xf]
  %v16 = vld [vmem:[%s0 + $0x4] sm:$0xf]
  %v17 = vld [vmem:[%s0 + $0x8] sm:$0xf]
  %v18 = vld [vmem:[%s0 + $0xc] sm:$0xf]
  %v19 = vld [vmem:[%s0 + $0x10] sm:$0xf]
  %v20 = vld [vmem:[%s0 + $0x14] sm:$0xf]
  %v21 = vld [vmem:[%s0 + $0x18] sm:$0xf]
  %v22 = vld [vmem:[%s0 + $0x1c] sm:$0xf]
  %v23 = vld [vmem:[%s1] sm:$0xf]
  %v24 = vld [vmem:[%s1 + $0x4] sm:$0xf]
  %v25 = vld [vmem:[%s1 + $0x8] sm:$0xf]
  %v26 = vld [vmem:[%s1 + $0xc] sm:$0xf]
  %v27 = vld [vmem:[%s2] sm:$0x1]
  %v29 = vlaneseq
  %v30 = vshrl.u32 %v29, 7
  %v31 = vsub.s32 0, %v30
  %v32 = vrot.slane %v27, %v31
  %v42 = vunpack.c.l.b16 %v15
  %v43 = vunpack.c.l.b16 %v16
  %v44 = vunpack.c.l.b16 %v17
  %v45 = vunpack.c.l.b16 %v18
  %v46 = vunpack.c.l.b16 %v19
  %v47 = vunpack.c.l.b16 %v20
  %v48 = vunpack.c.l.b16 %v21
  %v49 = vunpack.c.l.b16 %v22
  %v50 = vpack.c.b16 %v43, %v42
  %v51 = vpack.c.b16 %v45, %v44
  %v52 = vpack.c.b16 %v47, %v46
  %v53 = vpack.c.b16 %v49, %v48
  %v58 = vunpack.c.l.b16 %v23
  %v59 = vunpack.c.l.b16 %v24
  %v60 = vunpack.c.l.b16 %v25
  %v61 = vunpack.c.l.b16 %v26
  %v62 = vpack.c.b16 %v59, %v58
  %v63 = vpack.c.b16 %v61, %v60
  %vm66 = vcmask 261120
  %v68 = vsel %vm66, %v50, 0
  %v71 = vsel %vm66, %v51, 0
  %v74 = vsel %vm66, %v52, 0
  %v77 = vsel %vm66, %v53, 0
  %79 = vmatprep.subr.bf16.mxu0 0
  %80 = vmatpush1.bf16.msra.mxu0 %v62
  %81 = vmatprep.subr.bf16.mxu0 0
  %82 = vmatpush1.bf16.msra.mxu0 %v63
  %83 = vmatprep.subr.bf16.mxu0 0
  %84 = vmatpush1.bf16.msra.mxu0 0
  %85 = vmatprep.subr.bf16.mxu0 0
  %86 = vmatpush1.bf16.msra.mxu0 0
  %87 = vmatprep.subr.bf16.mxu0 0
  %88 = vmatpush1.bf16.msra.mxu0 0
  %89 = vmatprep.subr.bf16.mxu0 0
  %90 = vmatpush1.bf16.msra.mxu0 0
  %91 = vmatprep.subr.bf16.mxu0 0
  %92 = vmatpush1.bf16.msra.mxu0 0
  %93 = vmatprep.subr.bf16.mxu0 0
  %94 = vmatpush1.bf16.msra.mxu0 0
  %95 = vmatprep.subr.bf16.mxu0 0
  %96 = vmatpush1.bf16.msra.mxu0 0
  %97 = vmatprep.subr.bf16.mxu0 0
  %98 = vmatpush1.bf16.msra.mxu0 0
  %99 = vmatprep.subr.bf16.mxu0 0
  %100 = vmatpush1.bf16.msra.mxu0 0
  %101 = vmatprep.subr.bf16.mxu0 0
  %102 = vmatpush1.bf16.msra.mxu0 0
  %103 = vmatprep.subr.bf16.mxu0 0
  %104 = vmatpush1.bf16.msra.mxu0 0
  %105 = vmatprep.subr.bf16.mxu0 0
  %106 = vmatpush1.bf16.msra.mxu0 0
  %107 = vmatprep.subr.bf16.mxu0 0
  %108 = vmatpush1.bf16.msra.mxu0 0
  %109 = vmatprep.subr.bf16.mxu0 0
  %110 = vmatpush1.bf16.msra.mxu0 0
  %111 = vmatprep.mubr.bf16.mxu0 0
  %112 = vmatmul.mubr.bf16.gmra.mrb[0].mxu0 %v68
  %v113 = vpop.f32.mrb[0].mxu0
  %v114 = vadd.f32 %v32, %v113
  %v115 = vpop.f32.mrb[0].mxu0
  %v116 = vpop.f32.mrb[0].mxu0
  %v117 = vadd.f32 %v32, %v116
  %v118 = vpop.f32.mrb[0].mxu0
  %119 = vmatprep.mubr.bf16.mxu0 0
  %120 = vmatmul.mubr.bf16.gmra.mrb[0].mxu0 %v71
  %v121 = vpop.f32.mrb[0].mxu0
  %v122 = vadd.f32 %v32, %v121
  %v123 = vpop.f32.mrb[0].mxu0
  %v124 = vpop.f32.mrb[0].mxu0
  %v125 = vadd.f32 %v32, %v124
  %v126 = vpop.f32.mrb[0].mxu0
  %127 = vmatprep.mubr.bf16.mxu0 0
  %128 = vmatmul.mubr.bf16.gmra.mrb[0].mxu0 %v74
  %v129 = vpop.f32.mrb[0].mxu0
  %v130 = vadd.f32 %v32, %v129
  %v131 = vpop.f32.mrb[0].mxu0
  %v132 = vpop.f32.mrb[0].mxu0
  %v133 = vadd.f32 %v32, %v132
  %v134 = vpop.f32.mrb[0].mxu0
  %135 = vmatprep.mubr.bf16.mxu0 0
  %136 = vmatmul.mubr.bf16.gmra.mrb[0].mxu0 %v77
  %v137 = vpop.f32.mrb[0].mxu0
  %v138 = vadd.f32 %v32, %v137
  %v139 = vpop.f32.mrb[0].mxu0
  %v140 = vpop.f32.mrb[0].mxu0
  %v141 = vadd.f32 %v32, %v140
  %v142 = vpop.f32.mrb[0].mxu0
  %143 = vdwg.mxu0
  %v144 = vpack.c.bf16 %v117, %v114
  %v145 = vpack.c.bf16 %v125, %v122
  %v146 = vpack.c.bf16 %v133, %v130
  %v147 = vpack.c.bf16 %v141, %v138
  %v152 = vunpack.c.l.b16 %v144
  %v153 = vunpack.c.h.b16 %v144
  %v154 = vunpack.c.l.b16 %v145
  %v155 = vunpack.c.h.b16 %v145
  %v156 = vunpack.c.l.b16 %v146
  %v157 = vunpack.c.h.b16 %v146
  %v158 = vunpack.c.l.b16 %v147
  %v159 = vunpack.c.h.b16 %v147
  %v160 = vpack.c.b16 %v152, %v152
  %v161 = vpack.c.b16 %v153, %v153
  %v162 = vpack.c.b16 %v154, %v154
  %v163 = vpack.c.b16 %v155, %v155
  %v164 = vpack.c.b16 %v156, %v156
  %v165 = vpack.c.b16 %v157, %v157
  %v166 = vpack.c.b16 %v158, %v158
  %v167 = vpack.c.b16 %v159, %v159
  %176 = vst [vmem:[%s3] sm:$0xf] %v160
  %177 = vst [vmem:[%s3 + $0x4] sm:$0xf] %v161
  %178 = vst [vmem:[%s3 + $0x8] sm:$0xf] %v162
  %179 = vst [vmem:[%s3 + $0xc] sm:$0xf] %v163
  %180 = vst [vmem:[%s3 + $0x10] sm:$0xf] %v164
  %181 = vst [vmem:[%s3 + $0x14] sm:$0xf] %v165
  %182 = vst [vmem:[%s3 + $0x18] sm:$0xf] %v166
  %183 = vst [vmem:[%s3 + $0x1c] sm:$0xf] %v167
  // Predicated region
  $region14: #{rnn_model_forward.8} parent=0 // pred_check
    _
  $region15: #{rnn_model_forward.8} parent=0 // pred_check_branch
    %185 = sbr.rel (0) target = $region17
  $region16: #{rnn_model_forward.8} parent=0 // pred_region
    _
  $region17: #{rnn_model_forward.8} parent=0 // pred_fallthru
    _
  // Predicated region
  $region18: #{rnn_model_forward.8} parent=0 // pred_check
    _
  $region19: #{rnn_model_forward.8} parent=0 // pred_check_branch
    %187 = sbr.rel (0) target = $region21
  $region20: #{rnn_model_forward.8} parent=0 // pred_region
    _
  $region21: #{rnn_model_forward.8} parent=0 // pred_fallthru
    _

// kernel: rnn_model_forward.14
$region0: #{rnn_model_forward.14}
  #allocation0 [shape = 'u32[]', space=smem, size = 0x4, offset = 0x4, fixed_abs, tag = 'smem constant byte address 0x4 - core index']
  #allocation1 [shape = 'u32[144,128]{1,0:T(1,128)}', space=vmem, size = 0x12000, scoped, tag = 'internal scratch']
  %s0 = inlined_call_operand.vmem [shape: bf16[16,32], index: 0, kind: input, shape index: {}]
  %s1 = inlined_call_operand.vmem [shape: bf16[16,32], index: 1, kind: input, shape index: {}]
  %s2 = inlined_call_operand.vmem [shape: bf16[32,128], index: 2, kind: input, shape index: {}]
  %s3 = inlined_call_operand.vmem [shape: f32[1,128], index: 3, kind: input, shape index: {}]
  %s4 = inlined_call_operand.hbm [shape: f32[16,128], index: 4, kind: output, shape index: {}]
  %s5 = sld [smem:[#allocation0]]
  $region26: #{rnn_model_forward.14} parent=0
    _
  %s7 = ssub.s32 1, %s5
  %s8 = scalar_select 0, %s7, %s5
  $region1: #{rnn_model_forward.14} parent=0
    #allocation2 [shape = 'u8[8192]{0}', space=vmem, size = 0x2000, scoped, tag = 'output window, operand 0, single buffered']
    #allocation3 [shape = 's32[1]{0}', space=sflag, size = 0x4, scoped, tag = 'scoped memory for rnn_model_forward.14']
    %9 = vsyncpa [#allocation3], 0
    // Predicated region
    $region2: #{rnn_model_forward.14} parent=1 // pred_check
      _
    $region3: #{rnn_model_forward.14} parent=1 // pred_check_branch
      %11 = sbr.rel (0) target = $region5
    $region4: #{rnn_model_forward.14} parent=1 // pred_region
      _
    $region5: #{rnn_model_forward.14} parent=1 // pred_fallthru
      _
    // Predicated region
    $region6: #{rnn_model_forward.14} parent=1 // pred_check
      _
    $region7: #{rnn_model_forward.14} parent=1 // pred_check_branch
      %13 = sbr.rel (0) target = $region9
    $region8: #{rnn_model_forward.14} parent=1 // pred_region
      _
    $region9: #{rnn_model_forward.14} parent=1 // pred_fallthru
      _
    // Predicated region
    $region10: #{rnn_model_forward.14} parent=1 // pred_check
      _
    $region11: #{rnn_model_forward.14} parent=1 // pred_check_branch
      %15 = sbr.rel (0) target = $region13
    $region12: #{rnn_model_forward.14} parent=1 // pred_region
      _
    $region13: #{rnn_model_forward.14} parent=1 // pred_fallthru
      _
    // Predicated region
    $region14: #{rnn_model_forward.14} parent=1 // pred_check
      _
    $region15: #{rnn_model_forward.14} parent=1 // pred_check_branch
      %17 = sbr.rel (0) target = $region17
    $region16: #{rnn_model_forward.14} parent=1 // pred_region
      _
    $region17: #{rnn_model_forward.14} parent=1 // pred_fallthru
      _
    %v19 = vld [vmem:[%s0] sm:$0xf]
    %v20 = vld [vmem:[%s0 + $0x4] sm:$0xf]
    %v21 = vunpack.c.l.bf16 %v19
    %v22 = vunpack.c.l.bf16 %v20
    %v23 = vld [vmem:[%s1] sm:$0xf]
    %v24 = vld [vmem:[%s1 + $0x4] sm:$0xf]
    %v25 = vunpack.c.l.bf16 %v23
    %v26 = vunpack.c.l.bf16 %v24
    %v27 = vadd.f32 %v21, %v25
    %v28 = vadd.f32 %v22, %v26
    %v29 = vpack.c.bf16 %v28, %v27
    %v30 = vld [vmem:[%s2] sm:$0xf]
    %v31 = vld [vmem:[%s2 + $0x4] sm:$0xf]
    %v32 = vld [vmem:[%s2 + $0x8] sm:$0xf]
    %v33 = vld [vmem:[%s2 + $0xc] sm:$0xf]
    %v34 = vld [vmem:[%s3] sm:$0x1]
    %v36 = vlaneseq
    %v37 = vshrl.u32 %v36, 7
    %v38 = vsub.s32 0, %v37
    %v39 = vrot.slane %v34, %v38
    %v45 = vunpack.c.l.b16 %v30
    %v46 = vunpack.c.l.b16 %v31
    %v47 = vunpack.c.l.b16 %v32
    %v48 = vunpack.c.l.b16 %v33
    %v49 = vpack.c.b16 %v46, %v45
    %v50 = vpack.c.b16 %v48, %v47
    %vm53 = vcmask 261120
    %v55 = vsel %vm53, %v29, 0
    %57 = vmatprep.subr.bf16.mxu0 0
    %58 = vmatpush1.bf16.msra.mxu0 %v49
    %59 = vmatprep.subr.bf16.mxu0 0
    %60 = vmatpush1.bf16.msra.mxu0 %v50
    %61 = vmatprep.subr.bf16.mxu0 0
    %62 = vmatpush1.bf16.msra.mxu0 0
    %63 = vmatprep.subr.bf16.mxu0 0
    %64 = vmatpush1.bf16.msra.mxu0 0
    %65 = vmatprep.subr.bf16.mxu0 0
    %66 = vmatpush1.bf16.msra.mxu0 0
    %67 = vmatprep.subr.bf16.mxu0 0
    %68 = vmatpush1.bf16.msra.mxu0 0
    %69 = vmatprep.subr.bf16.mxu0 0
    %70 = vmatpush1.bf16.msra.mxu0 0
    %71 = vmatprep.subr.bf16.mxu0 0
    %72 = vmatpush1.bf16.msra.mxu0 0
    %73 = vmatprep.subr.bf16.mxu0 0
    %74 = vmatpush1.bf16.msra.mxu0 0
    %75 = vmatprep.subr.bf16.mxu0 0
    %76 = vmatpush1.bf16.msra.mxu0 0
    %77 = vmatprep.subr.bf16.mxu0 0
    %78 = vmatpush1.bf16.msra.mxu0 0
    %79 = vmatprep.subr.bf16.mxu0 0
    %80 = vmatpush1.bf16.msra.mxu0 0
    %81 = vmatprep.subr.bf16.mxu0 0
    %82 = vmatpush1.bf16.msra.mxu0 0
    %83 = vmatprep.subr.bf16.mxu0 0
    %84 = vmatpush1.bf16.msra.mxu0 0
    %85 = vmatprep.subr.bf16.mxu0 0
    %86 = vmatpush1.bf16.msra.mxu0 0
    %87 = vmatprep.subr.bf16.mxu0 0
    %88 = vmatpush1.bf16.msra.mxu0 0
    %89 = vmatprep.mubr.bf16.mxu0 0
    %90 = vmatmul.mubr.bf16.gmra.mrb[0].mxu0 %v55
    %v91 = vpop.f32.mrb[0].mxu0
    %v92 = vadd.f32 %v39, %v91
    %v93 = vpop.f32.mrb[0].mxu0
    %v94 = vpop.f32.mrb[0].mxu0
    %v95 = vadd.f32 %v39, %v94
    %v96 = vpop.f32.mrb[0].mxu0
    %97 = vdwg.mxu0
    %98 = vmax.xlane.f32.xlu0 %v92
    %v99 = vpop.xlane.xlu0 %98
    %100 = vmax.xlane.f32.xlu0 %v95
    %v101 = vpop.xlane.xlu0 %100
    %v102 = vsub.f32 %v92, %v99
    %v103 = vsub.f32 %v95, %v101
    %v104 = vmul.f32 %v102, 1.442695
    %v105 = vpow.pop %v104
    %v106 = vmul.f32 %v103, 1.442695
    %v107 = vpow.pop %v106
    %108 = vadd.xlane.f32.xlu0 %v105
    %v109 = vpop.xlane.xlu0 %108
    %110 = vadd.xlane.f32.xlu0 %v107
    %v111 = vpop.xlane.xlu0 %110
    %v112 = vlog2.pop %v109
    %v113 = vmul.f32 %v112, 0.6931472
    %v114 = vlog2.pop %v111
    %v115 = vmul.f32 %v114, 0.6931472
    %v116 = vsub.f32 %v102, %v113
    %v117 = vsub.f32 %v103, %v115
    %118 = vst [vmem:[#allocation2] sm:$0xff] %v116
    %119 = vst [vmem:[#allocation2 + $0x8] sm:$0xff] %v117
    // Predicated region
    $region18: #{rnn_model_forward.14} parent=1 // pred_check
      _
    $region19: #{rnn_model_forward.14} parent=1 // pred_check_branch
      %121 = sbr.rel (0) target = $region21
    $region20: #{rnn_model_forward.14} parent=1 // pred_region
      %s123 = ssub.s32 256, 256
      %124 = vsyncadd [#allocation3], %s123
      %s125 = sshll.u32 [#allocation2], 4
      %s126 = int_to_ptr.vmem [resolvable:$true] %s125
      %131 = dma.vmem_to_hbm [thread:$0]  %s126, 256, %s4, [#allocation3], 128, 128, 8
    $region21: #{rnn_model_forward.14} parent=1 // pred_fallthru
      _
    // Predicated region
    $region22: #{rnn_model_forward.14} parent=1 // pred_check
      _
    $region23: #{rnn_model_forward.14} parent=1 // pred_check_branch
      %133 = sbr.rel (0) target = $region25
    $region24: #{rnn_model_forward.14} parent=1 // pred_region
      %134 = dma.done [#allocation3], 256
    $region25: #{rnn_model_forward.14} parent=1 // pred_fallthru
      _
    %135 = vsyncpa [#allocation3], 1

// kernel: rnn_model_forward.9
$region0: #{rnn_model_forward.9}
  #allocation0 [shape = 'u32[]', space=smem, size = 0x4, offset = 0x4, fixed_abs, tag = 'smem constant byte address 0x4 - core index']
  #allocation1 [shape = 'u32[144,128]{1,0:T(1,128)}', space=vmem, size = 0x12000, scoped, tag = 'internal scratch']
  #allocation2 [shape = 'f32[8,32]{1,0:T(8,128)}', space=vmem, size = 0x1000, scoped, tag = 'scratch operand']
  #allocation3 [shape = 'f32[8,32]{1,0:T(8,128)}', space=vmem, size = 0x1000, scoped, tag = 'scratch operand']
  %s0 = inlined_call_operand.vmem [shape: bf16[8,8,128], index: 0, kind: input, shape index: {}]
  %s1 = inlined_call_operand.vmem [shape: f32[32,128], index: 1, kind: input, shape index: {}]
  %s2 = inlined_call_operand.vmem [shape: f32[8,32], index: 2, kind: input, shape index: {}]
  %s3 = inlined_call_operand.vmem [shape: f32[8,32], index: 3, kind: input, shape index: {}]
  %s4 = inlined_call_operand.vmem [shape: bf16[8,8,32], index: 4, kind: output, shape index: {0}]
  %s5 = inlined_call_operand.vmem [shape: f32[8,32], index: 5, kind: output, shape index: {1}]
  %s6 = inlined_call_operand.vmem [shape: f32[8,32], index: 6, kind: output, shape index: {2}]
  %7 = xla_tuple %s4, %s5, %s6
  %s8 = sld [smem:[#allocation0]]
  $region78: #{rnn_model_forward.9} parent=0
    _
  %s10 = ssub.s32 1, %s8
  %s11 = scalar_select 0, %s10, %s8
  // Predicated region
  $region2: #{rnn_model_forward.9} parent=0 // pred_check
    _
  $region3: #{rnn_model_forward.9} parent=0 // pred_check_branch
    %13 = sbr.rel (0) target = $region5
  $region4: #{rnn_model_forward.9} parent=0 // pred_region
    _
  $region5: #{rnn_model_forward.9} parent=0 // pred_fallthru
    _
  // Predicated region
  $region6: #{rnn_model_forward.9} parent=0 // pred_check
    _
  $region7: #{rnn_model_forward.9} parent=0 // pred_check_branch
    %15 = sbr.rel (0) target = $region9
  $region8: #{rnn_model_forward.9} parent=0 // pred_region
    _
  $region9: #{rnn_model_forward.9} parent=0 // pred_fallthru
    _
  // Predicated region
  $region10: #{rnn_model_forward.9} parent=0 // pred_check
    _
  $region11: #{rnn_model_forward.9} parent=0 // pred_check_branch
    %17 = sbr.rel (0) target = $region13
  $region12: #{rnn_model_forward.9} parent=0 // pred_region
    _
  $region13: #{rnn_model_forward.9} parent=0 // pred_fallthru
    _
  // Predicated region
  $region14: #{rnn_model_forward.9} parent=0 // pred_check
    _
  $region15: #{rnn_model_forward.9} parent=0 // pred_check_branch
    %19 = sbr.rel (0) target = $region17
  $region16: #{rnn_model_forward.9} parent=0 // pred_region
    _
  $region17: #{rnn_model_forward.9} parent=0 // pred_fallthru
    _
  %p20 = scmp.eq.s32.totalorder 0, 0
  // Predicated region
  $region18: #{rnn_model_forward.9} parent=0 // pred_check
    %p21 = pneg %p20
  $region19: #{rnn_model_forward.9} parent=0 // pred_check_branch
    %23 = sbr.rel (%p21) target = $region21
  $region20: #{rnn_model_forward.9} parent=0 // pred_region
    %v24 = vld [vmem:[%s2] sm:$0xff]
    %vm25 = vcmask 261120
    %26 = vst.msk [vmem:[#allocation2] sm:$0xff] %vm25, %v24
    %v27 = vld [vmem:[%s3] sm:$0xff]
    %28 = vst.msk [vmem:[#allocation3] sm:$0xff] %vm25, %v27
  $region21: #{rnn_model_forward.9} parent=0 // pred_fallthru
    _
  %v29 = vld [vmem:[%s1] sm:$0xff]
  %v30 = vld [vmem:[%s1 + $0x8] sm:$0xff]
  %v31 = vld [vmem:[%s1 + $0x10] sm:$0xff]
  %v32 = vld [vmem:[%s1 + $0x18] sm:$0xff]
  %s33 = smul.u32 0, 8
  %v34 = vld [vmem:[#allocation2] sm:$0xff]
  %v35 = vld [vmem:[#allocation3] sm:$0xff]
  %v36 = vld [vmem:[%s0] sm:$0xf]
  %v37 = vunpack.c.l.bf16 %v36
  %vm38 = vcmask 261120
  %v40 = vsel %vm38, %v34, 0
  %42 = vmatprep.subr.mxu0 0.0
  %43 = vmatpush1.msra.mxu0 %v29
  %44 = vmatprep.subr.mxu0 0.0
  %45 = vmatpush1.msra.mxu0 %v30
  %46 = vmatprep.subr.mxu0 0.0
  %47 = vmatpush1.msra.mxu0 %v31
  %48 = vmatprep.subr.mxu0 0.0
  %49 = vmatpush1.msra.mxu0 %v32
  %50 = vmatprep.subr.mxu0 0.0
  %51 = vmatpush1.msra.mxu0 0.0
  %52 = vmatprep.subr.mxu0 0.0
  %53 = vmatpush1.msra.mxu0 0.0
  %54 = vmatprep.subr.mxu0 0.0
  %55 = vmatpush1.msra.mxu0 0.0
  %56 = vmatprep.subr.mxu0 0.0
  %57 = vmatpush1.msra.mxu0 0.0
  %58 = vmatprep.subr.mxu0 0.0
  %59 = vmatpush1.msra.mxu0 0.0
  %60 = vmatprep.subr.mxu0 0.0
  %61 = vmatpush1.msra.mxu0 0.0
  %62 = vmatprep.subr.mxu0 0.0
  %63 = vmatpush1.msra.mxu0 0.0
  %64 = vmatprep.subr.mxu0 0.0
  %65 = vmatpush1.msra.mxu0 0.0
  %66 = vmatprep.subr.mxu0 0.0
  %67 = vmatpush1.msra.mxu0 0.0
  %68 = vmatprep.subr.mxu0 0.0
  %69 = vmatpush1.msra.mxu0 0.0
  %70 = vmatprep.subr.mxu0 0.0
  %71 = vmatpush1.msra.mxu0 0.0
  %72 = vmatprep.subr.mxu0 0.0
  %73 = vmatpush1.msra.mxu0 0.0
  %74 = vmatprep.subr.mxu0 0.0
  %75 = vmatpush1.msra.mxu0 0.0
  %76 = vmatprep.subr.mxu0 0.0
  %77 = vmatpush1.msra.mxu0 0.0
  %78 = vmatprep.subr.mxu0 0.0
  %79 = vmatpush1.msra.mxu0 0.0
  %80 = vmatprep.subr.mxu0 0.0
  %81 = vmatpush1.msra.mxu0 0.0
  %82 = vmatprep.subr.mxu0 0.0
  %83 = vmatpush1.msra.mxu0 0.0
  %84 = vmatprep.subr.mxu0 0.0
  %85 = vmatpush1.msra.mxu0 0.0
  %86 = vmatprep.subr.mxu0 0.0
  %87 = vmatpush1.msra.mxu0 0.0
  %88 = vmatprep.subr.mxu0 0.0
  %89 = vmatpush1.msra.mxu0 0.0
  %90 = vmatprep.subr.mxu0 0.0
  %91 = vmatpush1.msra.mxu0 0.0
  %92 = vmatprep.subr.mxu0 0.0
  %93 = vmatpush1.msra.mxu0 0.0
  %94 = vmatprep.subr.mxu0 0.0
  %95 = vmatpush1.msra.mxu0 0.0
  %96 = vmatprep.subr.mxu0 0.0
  %97 = vmatpush1.msra.mxu0 0.0
  %98 = vmatprep.subr.mxu0 0.0
  %99 = vmatpush1.msra.mxu0 0.0
  %100 = vmatprep.subr.mxu0 0.0
  %101 = vmatpush1.msra.mxu0 0.0
  %102 = vmatprep.subr.mxu0 0.0
  %103 = vmatpush1.msra.mxu0 0.0
  %104 = vmatprep.subr.mxu0 0.0
  %105 = vmatpush1.msra.mxu0 0.0
  %106 = vmatprep.mubr.f32.mxu0 0.0
  %107 = vmatmul.mubr.f32.gmra.mrb[0].mxu0 %v40
  %v108 = vpop.f32.mrb[0].mxu0
  %v109 = vadd.f32 0.0, %v108
  %v110 = vpop.f32.mrb[0].mxu0
  %111 = vdwg.mxu0
  %v112 = vadd.f32 %v37, %v109
  %v113 = vxor.u32 %v112, 2147483648
  %v114 = vmul.f32 %v113, 1.442695
  %v115 = vpow.pop %v114
  %v116 = vadd.f32 %v115, 1.0
  %v117 = vrcp.pop %v116
  %v118 = vmul.f32 1.0, %v117
  %v119 = vtanh.pop %v112
  %121 = vrot.lane.b32.xlu0 %v35, 32
  %v122 = vpop.permute.xlu0 %121
  %v124 = vmul.f32 %v118, %v122
  %126 = vrot.lane.b32.xlu0 %v119, 32
  %v127 = vpop.permute.xlu0 %126
  %v129 = vmul.f32 %v118, %v127
  %131 = vrot.lane.b32.xlu0 %v129, 32
  %v132 = vpop.permute.xlu0 %131
  %v134 = vadd.f32 %v124, %v132
  %v135 = vtanh.pop %v134
  %137 = vrot.lane.b32.xlu0 %v135, 32
  %v138 = vpop.permute.xlu0 %137
  %v140 = vmul.f32 %v118, %v138
  %v141 = vpack.c.bf16 %v140, %v140
  %v143 = vunpack.c.l.b16 %v141
  %v144 = vpack.c.b16 %v143, %v143
  %145 = vrot.lane.b32.xlu0 %v144, 64
  %v146 = vpop.permute.xlu0 %145
  %vm148 = vcmask 257024
  %149 = vst.msk [vmem:[%s4] sm:$0xf] %vm148, %v146
  %p150 = scmp.eq.s32.totalorder %s33, 7
  // Predicated region
  $region22: #{rnn_model_forward.9} parent=0 // pred_check
    %p151 = pneg %p150
  $region23: #{rnn_model_forward.9} parent=0 // pred_check_branch
    %153 = sbr.rel (%p151) target = $region25
  $region24: #{rnn_model_forward.9} parent=0 // pred_region
    %155 = vrot.lane.b32.xlu0 %v140, 64
    %v156 = vpop.permute.xlu0 %155
    %158 = vst.msk [vmem:[%s5] sm:$0xff] %vm38, %v156
    %160 = vrot.lane.b32.xlu0 %v134, 96
    %v161 = vpop.permute.xlu0 %160
    %163 = vst.msk [vmem:[%s6] sm:$0xff] %vm38, %v161
  $region25: #{rnn_model_forward.9} parent=0 // pred_fallthru
    _
  %s164 = scalar_lea.vmem %s0, 4
  %v165 = vld [vmem:[%s164] sm:$0xf]
  %v166 = vunpack.c.l.bf16 %v165
  %168 = vrot.lane.b32.xlu0 %v140, 64
  %v169 = vpop.permute.xlu0 %168
  %v170 = vsel %vm38, %v169, 0
  %172 = vmatprep.subr.mxu0 0.0
  %173 = vmatpush1.msra.mxu0 %v29
  %174 = vmatprep.subr.mxu0 0.0
  %175 = vmatpush1.msra.mxu0 %v30
  %176 = vmatprep.subr.mxu0 0.0
  %177 = vmatpush1.msra.mxu0 %v31
  %178 = vmatprep.subr.mxu0 0.0
  %179 = vmatpush1.msra.mxu0 %v32
  %180 = vmatprep.subr.mxu0 0.0
  %181 = vmatpush1.msra.mxu0 0.0
  %182 = vmatprep.subr.mxu0 0.0
  %183 = vmatpush1.msra.mxu0 0.0
  %184 = vmatprep.subr.mxu0 0.0
  %185 = vmatpush1.msra.mxu0 0.0
  %186 = vmatprep.subr.mxu0 0.0
  %187 = vmatpush1.msra.mxu0 0.0
  %188 = vmatprep.subr.mxu0 0.0
  %189 = vmatpush1.msra.mxu0 0.0
  %190 = vmatprep.subr.mxu0 0.0
  %191 = vmatpush1.msra.mxu0 0.0
  %192 = vmatprep.subr.mxu0 0.0
  %193 = vmatpush1.msra.mxu0 0.0
  %194 = vmatprep.subr.mxu0 0.0
  %195 = vmatpush1.msra.mxu0 0.0
  %196 = vmatprep.subr.mxu0 0.0
  %197 = vmatpush1.msra.mxu0 0.0
  %198 = vmatprep.subr.mxu0 0.0
  %199 = vmatpush1.msra.mxu0 0.0
  %200 = vmatprep.subr.mxu0 0.0
  %201 = vmatpush1.msra.mxu0 0.0
  %202 = vmatprep.subr.mxu0 0.0
  %203 = vmatpush1.msra.mxu0 0.0
  %204 = vmatprep.subr.mxu0 0.0
  %205 = vmatpush1.msra.mxu0 0.0
  %206 = vmatprep.subr.mxu0 0.0
  %207 = vmatpush1.msra.mxu0 0.0
  %208 = vmatprep.subr.mxu0 0.0
  %209 = vmatpush1.msra.mxu0 0.0
  %210 = vmatprep.subr.mxu0 0.0
  %211 = vmatpush1.msra.mxu0 0.0
  %212 = vmatprep.subr.mxu0 0.0
  %213 = vmatpush1.msra.mxu0 0.0
  %214 = vmatprep.subr.mxu0 0.0
  %215 = vmatpush1.msra.mxu0 0.0
  %216 = vmatprep.subr.mxu0 0.0
  %217 = vmatpush1.msra.mxu0 0.0
  %218 = vmatprep.subr.mxu0 0.0
  %219 = vmatpush1.msra.mxu0 0.0
  %220 = vmatprep.subr.mxu0 0.0
  %221 = vmatpush1.msra.mxu0 0.0
  %222 = vmatprep.subr.mxu0 0.0
  %223 = vmatpush1.msra.mxu0 0.0
  %224 = vmatprep.subr.mxu0 0.0
  %225 = vmatpush1.msra.mxu0 0.0
  %226 = vmatprep.subr.mxu0 0.0
  %227 = vmatpush1.msra.mxu0 0.0
  %228 = vmatprep.subr.mxu0 0.0
  %229 = vmatpush1.msra.mxu0 0.0
  %230 = vmatprep.subr.mxu0 0.0
  %231 = vmatpush1.msra.mxu0 0.0
  %232 = vmatprep.subr.mxu0 0.0
  %233 = vmatpush1.msra.mxu0 0.0
  %234 = vmatprep.subr.mxu0 0.0
  %235 = vmatpush1.msra.mxu0 0.0
  %236 = vmatprep.mubr.f32.mxu0 0.0
  %237 = vmatmul.mubr.f32.gmra.mrb[0].mxu0 %v170
  %v238 = vpop.f32.mrb[0].mxu0
  %v239 = vadd.f32 0.0, %v238
  %v240 = vpop.f32.mrb[0].mxu0
  %241 = vdwg.mxu0
  %v242 = vadd.f32 %v166, %v239
  %v243 = vxor.u32 %v242, 2147483648
  %v244 = vmul.f32 %v243, 1.442695
  %v245 = vpow.pop %v244
  %v246 = vadd.f32 %v245, 1.0
  %v247 = vrcp.pop %v246
  %v248 = vmul.f32 1.0, %v247
  %v249 = vtanh.pop %v242
  %v250 = vmul.f32 %v248, %v134
  %252 = vrot.lane.b32.xlu0 %v249, 32
  %v253 = vpop.permute.xlu0 %252
  %v255 = vmul.f32 %v248, %v253
  %257 = vrot.lane.b32.xlu0 %v255, 32
  %v258 = vpop.permute.xlu0 %257
  %v260 = vadd.f32 %v250, %v258
  %v261 = vtanh.pop %v260
  %263 = vrot.lane.b32.xlu0 %v261, 32
  %v264 = vpop.permute.xlu0 %263
  %v266 = vmul.f32 %v248, %v264
  %v267 = vpack.c.bf16 %v266, %v266
  %v269 = vunpack.c.l.b16 %v267
  %v270 = vpack.c.b16 %v269, %v269
  %271 = vrot.lane.b32.xlu0 %v270, 64
  %v272 = vpop.permute.xlu0 %271
  %s274 = scalar_lea.vmem %s4, 4
  %275 = vst.msk [vmem:[%s274] sm:$0xf] %vm148, %v272
  %s276 = sadd.s32 %s33, 1
  %p277 = scmp.eq.s32.totalorder %s276, 7
  // Predicated region
  $region26: #{rnn_model_forward.9} parent=0 // pred_check
    %p278 = pneg %p277
  $region27: #{rnn_model_forward.9} parent=0 // pred_check_branch
    %280 = sbr.rel (%p278) target = $region29
  $region28: #{rnn_model_forward.9} parent=0 // pred_region
    %282 = vrot.lane.b32.xlu0 %v266, 64
    %v283 = vpop.permute.xlu0 %282
    %285 = vst.msk [vmem:[%s5] sm:$0xff] %vm38, %v283
    %287 = vrot.lane.b32.xlu0 %v260, 96
    %v288 = vpop.permute.xlu0 %287
    %290 = vst.msk [vmem:[%s6] sm:$0xff] %vm38, %v288
  $region29: #{rnn_model_forward.9} parent=0 // pred_fallthru
    _
  %s291 = scalar_lea.vmem %s0, 8
  %v292 = vld [vmem:[%s291] sm:$0xf]
  %v293 = vunpack.c.l.bf16 %v292
  %295 = vrot.lane.b32.xlu0 %v266, 64
  %v296 = vpop.permute.xlu0 %295
  %v297 = vsel %vm38, %v296, 0
  %299 = vmatprep.subr.mxu0 0.0
  %300 = vmatpush1.msra.mxu0 %v29
  %301 = vmatprep.subr.mxu0 0.0
  %302 = vmatpush1.msra.mxu0 %v30
  %303 = vmatprep.subr.mxu0 0.0
  %304 = vmatpush1.msra.mxu0 %v31
  %305 = vmatprep.subr.mxu0 0.0
  %306 = vmatpush1.msra.mxu0 %v32
  %307 = vmatprep.subr.mxu0 0.0
  %308 = vmatpush1.msra.mxu0 0.0
  %309 = vmatprep.subr.mxu0 0.0
  %310 = vmatpush1.msra.mxu0 0.0
  %311 = vmatprep.subr.mxu0 0.0
  %312 = vmatpush1.msra.mxu0 0.0
  %313 = vmatprep.subr.mxu0 0.0
  %314 = vmatpush1.msra.mxu0 0.0
  %315 = vmatprep.subr.mxu0 0.0
  %316 = vmatpush1.msra.mxu0 0.0
  %317 = vmatprep.subr.mxu0 0.0
  %318 = vmatpush1.msra.mxu0 0.0
  %319 = vmatprep.subr.mxu0 0.0
  %320 = vmatpush1.msra.mxu0 0.0
  %321 = vmatprep.subr.mxu0 0.0
  %322 = vmatpush1.msra.mxu0 0.0
  %323 = vmatprep.subr.mxu0 0.0
  %324 = vmatpush1.msra.mxu0 0.0
  %325 = vmatprep.subr.mxu0 0.0
  %326 = vmatpush1.msra.mxu0 0.0
  %327 = vmatprep.subr.mxu0 0.0
  %328 = vmatpush1.msra.mxu0 0.0
  %329 = vmatprep.subr.mxu0 0.0
  %330 = vmatpush1.msra.mxu0 0.0
  %331 = vmatprep.subr.mxu0 0.0
  %332 = vmatpush1.msra.mxu0 0.0
  %333 = vmatprep.subr.mxu0 0.0
  %334 = vmatpush1.msra.mxu0 0.0
  %335 = vmatprep.subr.mxu0 0.0
  %336 = vmatpush1.msra.mxu0 0.0
  %337 = vmatprep.subr.mxu0 0.0
  %338 = vmatpush1.msra.mxu0 0.0
  %339 = vmatprep.subr.mxu0 0.0
  %340 = vmatpush1.msra.mxu0 0.0
  %341 = vmatprep.subr.mxu0 0.0
  %342 = vmatpush1.msra.mxu0 0.0
  %343 = vmatprep.subr.mxu0 0.0
  %344 = vmatpush1.msra.mxu0 0.0
  %345 = vmatprep.subr.mxu0 0.0
  %346 = vmatpush1.msra.mxu0 0.0
  %347 = vmatprep.subr.mxu0 0.0
  %348 = vmatpush1.msra.mxu0 0.0
  %349 = vmatprep.subr.mxu0 0.0
  %350 = vmatpush1.msra.mxu0 0.0
  %351 = vmatprep.subr.mxu0 0.0
  %352 = vmatpush1.msra.mxu0 0.0
  %353 = vmatprep.subr.mxu0 0.0
  %354 = vmatpush1.msra.mxu0 0.0
  %355 = vmatprep.subr.mxu0 0.0
  %356 = vmatpush1.msra.mxu0 0.0
  %357 = vmatprep.subr.mxu0 0.0
  %358 = vmatpush1.msra.mxu0 0.0
  %359 = vmatprep.subr.mxu0 0.0
  %360 = vmatpush1.msra.mxu0 0.0
  %361 = vmatprep.subr.mxu0 0.0
  %362 = vmatpush1.msra.mxu0 0.0
  %363 = vmatprep.mubr.f32.mxu0 0.0
  %364 = vmatmul.mubr.f32.gmra.mrb[0].mxu0 %v297
  %v365 = vpop.f32.mrb[0].mxu0
  %v366 = vadd.f32 0.0, %v365
  %v367 = vpop.f32.mrb[0].mxu0
  %368 = vdwg.mxu0
  %v369 = vadd.f32 %v293, %v366
  %v370 = vxor.u32 %v369, 2147483648
  %v371 = vmul.f32 %v370, 1.442695
  %v372 = vpow.pop %v371
  %v373 = vadd.f32 %v372, 1.0
  %v374 = vrcp.pop %v373
  %v375 = vmul.f32 1.0, %v374
  %v376 = vtanh.pop %v369
  %v377 = vmul.f32 %v375, %v260
  %379 = vrot.lane.b32.xlu0 %v376, 32
  %v380 = vpop.permute.xlu0 %379
  %v382 = vmul.f32 %v375, %v380
  %384 = vrot.lane.b32.xlu0 %v382, 32
  %v385 = vpop.permute.xlu0 %384
  %v387 = vadd.f32 %v377, %v385
  %v388 = vtanh.pop %v387
  %390 = vrot.lane.b32.xlu0 %v388, 32
  %v391 = vpop.permute.xlu0 %390
  %v393 = vmul.f32 %v375, %v391
  %v394 = vpack.c.bf16 %v393, %v393
  %v396 = vunpack.c.l.b16 %v394
  %v397 = vpack.c.b16 %v396, %v396
  %398 = vrot.lane.b32.xlu0 %v397, 64
  %v399 = vpop.permute.xlu0 %398
  %s401 = scalar_lea.vmem %s4, 8
  %402 = vst.msk [vmem:[%s401] sm:$0xf] %vm148, %v399
  %s403 = sadd.s32 %s33, 2
  %p404 = scmp.eq.s32.totalorder %s403, 7
  // Predicated region
  $region30: #{rnn_model_forward.9} parent=0 // pred_check
    %p405 = pneg %p404
  $region31: #{rnn_model_forward.9} parent=0 // pred_check_branch
    %407 = sbr.rel (%p405) target = $region33
  $region32: #{rnn_model_forward.9} parent=0 // pred_region
    %409 = vrot.lane.b32.xlu0 %v393, 64
    %v410 = vpop.permute.xlu0 %409
    %412 = vst.msk [vmem:[%s5] sm:$0xff] %vm38, %v410
    %414 = vrot.lane.b32.xlu0 %v387, 96
    %v415 = vpop.permute.xlu0 %414
    %417 = vst.msk [vmem:[%s6] sm:$0xff] %vm38, %v415
  $region33: #{rnn_model_forward.9} parent=0 // pred_fallthru
    _
  %s418 = scalar_lea.vmem %s0, 12
  %v419 = vld [vmem:[%s418] sm:$0xf]
  %v420 = vunpack.c.l.bf16 %v419
  %422 = vrot.lane.b32.xlu0 %v393, 64
  %v423 = vpop.permute.xlu0 %422
  %v424 = vsel %vm38, %v423, 0
  %426 = vmatprep.subr.mxu0 0.0
  %427 = vmatpush1.msra.mxu0 %v29
  %428 = vmatprep.subr.mxu0 0.0
  %429 = vmatpush1.msra.mxu0 %v30
  %430 = vmatprep.subr.mxu0 0.0
  %431 = vmatpush1.msra.mxu0 %v31
  %432 = vmatprep.subr.mxu0 0.0
  %433 = vmatpush1.msra.mxu0 %v32
  %434 = vmatprep.subr.mxu0 0.0
  %435 = vmatpush1.msra.mxu0 0.0
  %436 = vmatprep.subr.mxu0 0.0
  %437 = vmatpush1.msra.mxu0 0.0
  %438 = vmatprep.subr.mxu0 0.0
  %439 = vmatpush1.msra.mxu0 0.0
  %440 = vmatprep.subr.mxu0 0.0
  %441 = vmatpush1.msra.mxu0 0.0
  %442 = vmatprep.subr.mxu0 0.0
  %443 = vmatpush1.msra.mxu0 0.0
  %444 = vmatprep.subr.mxu0 0.0
  %445 = vmatpush1.msra.mxu0 0.0
  %446 = vmatprep.subr.mxu0 0.0
  %447 = vmatpush1.msra.mxu0 0.0
  %448 = vmatprep.subr.mxu0 0.0
  %449 = vmatpush1.msra.mxu0 0.0
  %450 = vmatprep.subr.mxu0 0.0
  %451 = vmatpush1.msra.mxu0 0.0
  %452 = vmatprep.subr.mxu0 0.0
  %453 = vmatpush1.msra.mxu0 0.0
  %454 = vmatprep.subr.mxu0 0.0
  %455 = vmatpush1.msra.mxu0 0.0
  %456 = vmatprep.subr.mxu0 0.0
  %457 = vmatpush1.msra.mxu0 0.0
  %458 = vmatprep.subr.mxu0 0.0
  %459 = vmatpush1.msra.mxu0 0.0
  %460 = vmatprep.subr.mxu0 0.0
  %461 = vmatpush1.msra.mxu0 0.0
  %462 = vmatprep.subr.mxu0 0.0
  %463 = vmatpush1.msra.mxu0 0.0
  %464 = vmatprep.subr.mxu0 0.0
  %465 = vmatpush1.msra.mxu0 0.0
  %466 = vmatprep.subr.mxu0 0.0
  %467 = vmatpush1.msra.mxu0 0.0
  %468 = vmatprep.subr.mxu0 0.0
  %469 = vmatpush1.msra.mxu0 0.0
  %470 = vmatprep.subr.mxu0 0.0
  %471 = vmatpush1.msra.mxu0 0.0
  %472 = vmatprep.subr.mxu0 0.0
  %473 = vmatpush1.msra.mxu0 0.0
  %474 = vmatprep.subr.mxu0 0.0
  %475 = vmatpush1.msra.mxu0 0.0
  %476 = vmatprep.subr.mxu0 0.0
  %477 = vmatpush1.msra.mxu0 0.0
  %478 = vmatprep.subr.mxu0 0.0
  %479 = vmatpush1.msra.mxu0 0.0
  %480 = vmatprep.subr.mxu0 0.0
  %481 = vmatpush1.msra.mxu0 0.0
  %482 = vmatprep.subr.mxu0 0.0
  %483 = vmatpush1.msra.mxu0 0.0
  %484 = vmatprep.subr.mxu0 0.0
  %485 = vmatpush1.msra.mxu0 0.0
  %486 = vmatprep.subr.mxu0 0.0
  %487 = vmatpush1.msra.mxu0 0.0
  %488 = vmatprep.subr.mxu0 0.0
  %489 = vmatpush1.msra.mxu0 0.0
  %490 = vmatprep.mubr.f32.mxu0 0.0
  %491 = vmatmul.mubr.f32.gmra.mrb[0].mxu0 %v424
  %v492 = vpop.f32.mrb[0].mxu0
  %v493 = vadd.f32 0.0, %v492
  %v494 = vpop.f32.mrb[0].mxu0
  %495 = vdwg.mxu0
  %v496 = vadd.f32 %v420, %v493
  %v497 = vxor.u32 %v496, 2147483648
  %v498 = vmul.f32 %v497, 1.442695
  %v499 = vpow.pop %v498
  %v500 = vadd.f32 %v499, 1.0
  %v501 = vrcp.pop %v500
  %v502 = vmul.f32 1.0, %v501
  %v503 = vtanh.pop %v496
  %v504 = vmul.f32 %v502, %v387
  %506 = vrot.lane.b32.xlu0 %v503, 32
  %v507 = vpop.permute.xlu0 %506
  %v509 = vmul.f32 %v502, %v507
  %511 = vrot.lane.b32.xlu0 %v509, 32
  %v512 = vpop.permute.xlu0 %511
  %v514 = vadd.f32 %v504, %v512
  %v515 = vtanh.pop %v514
  %517 = vrot.lane.b32.xlu0 %v515, 32
  %v518 = vpop.permute.xlu0 %517
  %v520 = vmul.f32 %v502, %v518
  %v521 = vpack.c.bf16 %v520, %v520
  %v523 = vunpack.c.l.b16 %v521
  %v524 = vpack.c.b16 %v523, %v523
  %525 = vrot.lane.b32.xlu0 %v524, 64
  %v526 = vpop.permute.xlu0 %525
  %s528 = scalar_lea.vmem %s4, 12
  %529 = vst.msk [vmem:[%s528] sm:$0xf] %vm148, %v526
  %s530 = sadd.s32 %s33, 3
  %p531 = scmp.eq.s32.totalorder %s530, 7
  // Predicated region
  $region34: #{rnn_model_forward.9} parent=0 // pred_check
    %p532 = pneg %p531
  $region35: #{rnn_model_forward.9} parent=0 // pred_check_branch
    %534 = sbr.rel (%p532) target = $region37
  $region36: #{rnn_model_forward.9} parent=0 // pred_region
    %536 = vrot.lane.b32.xlu0 %v520, 64
    %v537 = vpop.permute.xlu0 %536
    %539 = vst.msk [vmem:[%s5] sm:$0xff] %vm38, %v537
    %541 = vrot.lane.b32.xlu0 %v514, 96
    %v542 = vpop.permute.xlu0 %541
    %544 = vst.msk [vmem:[%s6] sm:$0xff] %vm38, %v542
  $region37: #{rnn_model_forward.9} parent=0 // pred_fallthru
    _
  %s545 = scalar_lea.vmem %s0, 16
  %v546 = vld [vmem:[%s545] sm:$0xf]
  %v547 = vunpack.c.l.bf16 %v546
  %549 = vrot.lane.b32.xlu0 %v520, 64
  %v550 = vpop.permute.xlu0 %549
  %v551 = vsel %vm38, %v550, 0
  %553 = vmatprep.subr.mxu0 0.0
  %554 = vmatpush1.msra.mxu0 %v29
  %555 = vmatprep.subr.mxu0 0.0
  %556 = vmatpush1.msra.mxu0 %v30
  %557 = vmatprep.subr.mxu0 0.0
  %558 = vmatpush1.msra.mxu0 %v31
  %559 = vmatprep.subr.mxu0 0.0
  %560 = vmatpush1.msra.mxu0 %v32
  %561 = vmatprep.subr.mxu0 0.0
  %562 = vmatpush1.msra.mxu0 0.0
  %563 = vmatprep.subr.mxu0 0.0
  %564 = vmatpush1.msra.mxu0 0.0
  %565 = vmatprep.subr.mxu0 0.0
  %566 = vmatpush1.msra.mxu0 0.0
  %567 = vmatprep.subr.mxu0 0.0
  %568 = vmatpush1.msra.mxu0 0.0
  %569 = vmatprep.subr.mxu0 0.0
  %570 = vmatpush1.msra.mxu0 0.0
  %571 = vmatprep.subr.mxu0 0.0
  %572 = vmatpush1.msra.mxu0 0.0
  %573 = vmatprep.subr.mxu0 0.0
  %574 = vmatpush1.msra.mxu0 0.0
  %575 = vmatprep.subr.mxu0 0.0
  %576 = vmatpush1.msra.mxu0 0.0
  %577 = vmatprep.subr.mxu0 0.0
  %578 = vmatpush1.msra.mxu0 0.0
  %579 = vmatprep.subr.mxu0 0.0
  %580 = vmatpush1.msra.mxu0 0.0
  %581 = vmatprep.subr.mxu0 0.0
  %582 = vmatpush1.msra.mxu0 0.0
  %583 = vmatprep.subr.mxu0 0.0
  %584 = vmatpush1.msra.mxu0 0.0
  %585 = vmatprep.subr.mxu0 0.0
  %586 = vmatpush1.msra.mxu0 0.0
  %587 = vmatprep.subr.mxu0 0.0
  %588 = vmatpush1.msra.mxu0 0.0
  %589 = vmatprep.subr.mxu0 0.0
  %590 = vmatpush1.msra.mxu0 0.0
  %591 = vmatprep.subr.mxu0 0.0
  %592 = vmatpush1.msra.mxu0 0.0
  %593 = vmatprep.subr.mxu0 0.0
  %594 = vmatpush1.msra.mxu0 0.0
  %595 = vmatprep.subr.mxu0 0.0
  %596 = vmatpush1.msra.mxu0 0.0
  %597 = vmatprep.subr.mxu0 0.0
  %598 = vmatpush1.msra.mxu0 0.0
  %599 = vmatprep.subr.mxu0 0.0
  %600 = vmatpush1.msra.mxu0 0.0
  %601 = vmatprep.subr.mxu0 0.0
  %602 = vmatpush1.msra.mxu0 0.0
  %603 = vmatprep.subr.mxu0 0.0
  %604 = vmatpush1.msra.mxu0 0.0
  %605 = vmatprep.subr.mxu0 0.0
  %606 = vmatpush1.msra.mxu0 0.0
  %607 = vmatprep.subr.mxu0 0.0
  %608 = vmatpush1.msra.mxu0 0.0
  %609 = vmatprep.subr.mxu0 0.0
  %610 = vmatpush1.msra.mxu0 0.0
  %611 = vmatprep.subr.mxu0 0.0
  %612 = vmatpush1.msra.mxu0 0.0
  %613 = vmatprep.subr.mxu0 0.0
  %614 = vmatpush1.msra.mxu0 0.0
  %615 = vmatprep.subr.mxu0 0.0
  %616 = vmatpush1.msra.mxu0 0.0
  %617 = vmatprep.mubr.f32.mxu0 0.0
  %618 = vmatmul.mubr.f32.gmra.mrb[0].mxu0 %v551
  %v619 = vpop.f32.mrb[0].mxu0
  %v620 = vadd.f32 0.0, %v619
  %v621 = vpop.f32.mrb[0].mxu0
  %622 = vdwg.mxu0
  %v623 = vadd.f32 %v547, %v620
  %v624 = vxor.u32 %v623, 2147483648
  %v625 = vmul.f32 %v624, 1.442695
  %v626 = vpow.pop %v625
  %v627 = vadd.f32 %v626, 1.0
  %v628 = vrcp.pop %v627
  %v629 = vmul.f32 1.0, %v628
  %v630 = vtanh.pop %v623
  %v631 = vmul.f32 %v629, %v514
  %633 = vrot.lane.b32.xlu0 %v630, 32
  %v634 = vpop.permute.xlu0 %633
  %v636 = vmul.f32 %v629, %v634
  %638 = vrot.lane.b32.xlu0 %v636, 32
  %v639 = vpop.permute.xlu0 %638
  %v641 = vadd.f32 %v631, %v639
  %v642 = vtanh.pop %v641
  %644 = vrot.lane.b32.xlu0 %v642, 32
  %v645 = vpop.permute.xlu0 %644
  %v647 = vmul.f32 %v629, %v645
  %v648 = vpack.c.bf16 %v647, %v647
  %v650 = vunpack.c.l.b16 %v648
  %v651 = vpack.c.b16 %v650, %v650
  %652 = vrot.lane.b32.xlu0 %v651, 64
  %v653 = vpop.permute.xlu0 %652
  %s655 = scalar_lea.vmem %s4, 16
  %656 = vst.msk [vmem:[%s655] sm:$0xf] %vm148, %v653
  %s657 = sadd.s32 %s33, 4
  %p658 = scmp.eq.s32.totalorder %s657, 7
  // Predicated region
  $region38: #{rnn_model_forward.9} parent=0 // pred_check
    %p659 = pneg %p658
  $region39: #{rnn_model_forward.9} parent=0 // pred_check_branch
    %661 = sbr.rel (%p659) target = $region41
  $region40: #{rnn_model_forward.9} parent=0 // pred_region
    %663 = vrot.lane.b32.xlu0 %v647, 64
    %v664 = vpop.permute.xlu0 %663
    %666 = vst.msk [vmem:[%s5] sm:$0xff] %vm38, %v664
    %668 = vrot.lane.b32.xlu0 %v641, 96
    %v669 = vpop.permute.xlu0 %668
    %671 = vst.msk [vmem:[%s6] sm:$0xff] %vm38, %v669
  $region41: #{rnn_model_forward.9} parent=0 // pred_fallthru
    _
  %s672 = scalar_lea.vmem %s0, 20
  %v673 = vld [vmem:[%s672] sm:$0xf]
  %v674 = vunpack.c.l.bf16 %v673
  %676 = vrot.lane.b32.xlu0 %v647, 64
  %v677 = vpop.permute.xlu0 %676
  %v678 = vsel %vm38, %v677, 0
  %680 = vmatprep.subr.mxu0 0.0
  %681 = vmatpush1.msra.mxu0 %v29
  %682 = vmatprep.subr.mxu0 0.0
  %683 = vmatpush1.msra.mxu0 %v30
  %684 = vmatprep.subr.mxu0 0.0
  %685 = vmatpush1.msra.mxu0 %v31
  %686 = vmatprep.subr.mxu0 0.0
  %687 = vmatpush1.msra.mxu0 %v32
  %688 = vmatprep.subr.mxu0 0.0
  %689 = vmatpush1.msra.mxu0 0.0
  %690 = vmatprep.subr.mxu0 0.0
  %691 = vmatpush1.msra.mxu0 0.0
  %692 = vmatprep.subr.mxu0 0.0
  %693 = vmatpush1.msra.mxu0 0.0
  %694 = vmatprep.subr.mxu0 0.0
  %695 = vmatpush1.msra.mxu0 0.0
  %696 = vmatprep.subr.mxu0 0.0
  %697 = vmatpush1.msra.mxu0 0.0
  %698 = vmatprep.subr.mxu0 0.0
  %699 = vmatpush1.msra.mxu0 0.0
  %700 = vmatprep.subr.mxu0 0.0
  %701 = vmatpush1.msra.mxu0 0.0
  %702 = vmatprep.subr.mxu0 0.0
  %703 = vmatpush1.msra.mxu0 0.0
  %704 = vmatprep.subr.mxu0 0.0
  %705 = vmatpush1.msra.mxu0 0.0
  %706 = vmatprep.subr.mxu0 0.0
  %707 = vmatpush1.msra.mxu0 0.0
  %708 = vmatprep.subr.mxu0 0.0
  %709 = vmatpush1.msra.mxu0 0.0
  %710 = vmatprep.subr.mxu0 0.0
  %711 = vmatpush1.msra.mxu0 0.0
  %712 = vmatprep.subr.mxu0 0.0
  %713 = vmatpush1.msra.mxu0 0.0
  %714 = vmatprep.subr.mxu0 0.0
  %715 = vmatpush1.msra.mxu0 0.0
  %716 = vmatprep.subr.mxu0 0.0
  %717 = vmatpush1.msra.mxu0 0.0
  %718 = vmatprep.subr.mxu0 0.0
  %719 = vmatpush1.msra.mxu0 0.0
  %720 = vmatprep.subr.mxu0 0.0
  %721 = vmatpush1.msra.mxu0 0.0
  %722 = vmatprep.subr.mxu0 0.0
  %723 = vmatpush1.msra.mxu0 0.0
  %724 = vmatprep.subr.mxu0 0.0
  %725 = vmatpush1.msra.mxu0 0.0
  %726 = vmatprep.subr.mxu0 0.0
  %727 = vmatpush1.msra.mxu0 0.0
  %728 = vmatprep.subr.mxu0 0.0
  %729 = vmatpush1.msra.mxu0 0.0
  %730 = vmatprep.subr.mxu0 0.0
  %731 = vmatpush1.msra.mxu0 0.0
  %732 = vmatprep.subr.mxu0 0.0
  %733 = vmatpush1.msra.mxu0 0.0
  %734 = vmatprep.subr.mxu0 0.0
  %735 = vmatpush1.msra.mxu0 0.0
  %736 = vmatprep.subr.mxu0 0.0
  %737 = vmatpush1.msra.mxu0 0.0
  %738 = vmatprep.subr.mxu0 0.0
  %739 = vmatpush1.msra.mxu0 0.0
  %740 = vmatprep.subr.mxu0 0.0
  %741 = vmatpush1.msra.mxu0 0.0
  %742 = vmatprep.subr.mxu0 0.0
  %743 = vmatpush1.msra.mxu0 0.0
  %744 = vmatprep.mubr.f32.mxu0 0.0
  %745 = vmatmul.mubr.f32.gmra.mrb[0].mxu0 %v678
  %v746 = vpop.f32.mrb[0].mxu0
  %v747 = vadd.f32 0.0, %v746
  %v748 = vpop.f32.mrb[0].mxu0
  %749 = vdwg.mxu0
  %v750 = vadd.f32 %v674, %v747
  %v751 = vxor.u32 %v750, 2147483648
  %v752 = vmul.f32 %v751, 1.442695
  %v753 = vpow.pop %v752
  %v754 = vadd.f32 %v753, 1.0
  %v755 = vrcp.pop %v754
  %v756 = vmul.f32 1.0, %v755
  %v757 = vtanh.pop %v750
  %v758 = vmul.f32 %v756, %v641
  %760 = vrot.lane.b32.xlu0 %v757, 32
  %v761 = vpop.permute.xlu0 %760
  %v763 = vmul.f32 %v756, %v761
  %765 = vrot.lane.b32.xlu0 %v763, 32
  %v766 = vpop.permute.xlu0 %765
  %v768 = vadd.f32 %v758, %v766
  %v769 = vtanh.pop %v768
  %771 = vrot.lane.b32.xlu0 %v769, 32
  %v772 = vpop.permute.xlu0 %771
  %v774 = vmul.f32 %v756, %v772
  %v775 = vpack.c.bf16 %v774, %v774
  %v777 = vunpack.c.l.b16 %v775
  %v778 = vpack.c.b16 %v777, %v777
  %779 = vrot.lane.b32.xlu0 %v778, 64
  %v780 = vpop.permute.xlu0 %779
  %s782 = scalar_lea.vmem %s4, 20
  %783 = vst.msk [vmem:[%s782] sm:$0xf] %vm148, %v780
  %s784 = sadd.s32 %s33, 5
  %p785 = scmp.eq.s32.totalorder %s784, 7
  // Predicated region
  $region42: #{rnn_model_forward.9} parent=0 // pred_check
    %p786 = pneg %p785
  $region43: #{rnn_model_forward.9} parent=0 // pred_check_branch
    %788 = sbr.rel (%p786) target = $region45
  $region44: #{rnn_model_forward.9} parent=0 // pred_region
    %790 = vrot.lane.b32.xlu0 %v774, 64
    %v791 = vpop.permute.xlu0 %790
    %793 = vst.msk [vmem:[%s5] sm:$0xff] %vm38, %v791
    %795 = vrot.lane.b32.xlu0 %v768, 96
    %v796 = vpop.permute.xlu0 %795
    %798 = vst.msk [vmem:[%s6] sm:$0xff] %vm38, %v796
  $region45: #{rnn_model_forward.9} parent=0 // pred_fallthru
    _
  %s799 = scalar_lea.vmem %s0, 24
  %v800 = vld [vmem:[%s799] sm:$0xf]
  %v801 = vunpack.c.l.bf16 %v800
  %803 = vrot.lane.b32.xlu0 %v774, 64
  %v804 = vpop.permute.xlu0 %803
  %v805 = vsel %vm38, %v804, 0
  %807 = vmatprep.subr.mxu0 0.0
  %808 = vmatpush1.msra.mxu0 %v29
  %809 = vmatprep.subr.mxu0 0.0
  %810 = vmatpush1.msra.mxu0 %v30
  %811 = vmatprep.subr.mxu0 0.0
  %812 = vmatpush1.msra.mxu0 %v31
  %813 = vmatprep.subr.mxu0 0.0
  %814 = vmatpush1.msra.mxu0 %v32
  %815 = vmatprep.subr.mxu0 0.0
  %816 = vmatpush1.msra.mxu0 0.0
  %817 = vmatprep.subr.mxu0 0.0
  %818 = vmatpush1.msra.mxu0 0.0
  %819 = vmatprep.subr.mxu0 0.0
  %820 = vmatpush1.msra.mxu0 0.0
  %821 = vmatprep.subr.mxu0 0.0
  %822 = vmatpush1.msra.mxu0 0.0
  %823 = vmatprep.subr.mxu0 0.0
  %824 = vmatpush1.msra.mxu0 0.0
  %825 = vmatprep.subr.mxu0 0.0
  %826 = vmatpush1.msra.mxu0 0.0
  %827 = vmatprep.subr.mxu0 0.0
  %828 = vmatpush1.msra.mxu0 0.0
  %829 = vmatprep.subr.mxu0 0.0
  %830 = vmatpush1.msra.mxu0 0.0
  %831 = vmatprep.subr.mxu0 0.0
  %832 = vmatpush1.msra.mxu0 0.0
  %833 = vmatprep.subr.mxu0 0.0
  %834 = vmatpush1.msra.mxu0 0.0
  %835 = vmatprep.subr.mxu0 0.0
  %836 = vmatpush1.msra.mxu0 0.0
  %837 = vmatprep.subr.mxu0 0.0
  %838 = vmatpush1.msra.mxu0 0.0
  %839 = vmatprep.subr.mxu0 0.0
  %840 = vmatpush1.msra.mxu0 0.0
  %841 = vmatprep.subr.mxu0 0.0
  %842 = vmatpush1.msra.mxu0 0.0
  %843 = vmatprep.subr.mxu0 0.0
  %844 = vmatpush1.msra.mxu0 0.0
  %845 = vmatprep.subr.mxu0 0.0
  %846 = vmatpush1.msra.mxu0 0.0
  %847 = vmatprep.subr.mxu0 0.0
  %848 = vmatpush1.msra.mxu0 0.0
  %849 = vmatprep.subr.mxu0 0.0
  %850 = vmatpush1.msra.mxu0 0.0
  %851 = vmatprep.subr.mxu0 0.0
  %852 = vmatpush1.msra.mxu0 0.0
  %853 = vmatprep.subr.mxu0 0.0
  %854 = vmatpush1.msra.mxu0 0.0
  %855 = vmatprep.subr.mxu0 0.0
  %856 = vmatpush1.msra.mxu0 0.0
  %857 = vmatprep.subr.mxu0 0.0
  %858 = vmatpush1.msra.mxu0 0.0
  %859 = vmatprep.subr.mxu0 0.0
  %860 = vmatpush1.msra.mxu0 0.0
  %861 = vmatprep.subr.mxu0 0.0
  %862 = vmatpush1.msra.mxu0 0.0
  %863 = vmatprep.subr.mxu0 0.0
  %864 = vmatpush1.msra.mxu0 0.0
  %865 = vmatprep.subr.mxu0 0.0
  %866 = vmatpush1.msra.mxu0 0.0
  %867 = vmatprep.subr.mxu0 0.0
  %868 = vmatpush1.msra.mxu0 0.0
  %869 = vmatprep.subr.mxu0 0.0
  %870 = vmatpush1.msra.mxu0 0.0
  %871 = vmatprep.mubr.f32.mxu0 0.0
  %872 = vmatmul.mubr.f32.gmra.mrb[0].mxu0 %v805
  %v873 = vpop.f32.mrb[0].mxu0
  %v874 = vadd.f32 0.0, %v873
  %v875 = vpop.f32.mrb[0].mxu0
  %876 = vdwg.mxu0
  %v877 = vadd.f32 %v801, %v874
  %v878 = vxor.u32 %v877, 2147483648
  %v879 = vmul.f32 %v878, 1.442695
  %v880 = vpow.pop %v879
  %v881 = vadd.f32 %v880, 1.0
  %v882 = vrcp.pop %v881
  %v883 = vmul.f32 1.0, %v882
  %v884 = vtanh.pop %v877
  %v885 = vmul.f32 %v883, %v768
  %887 = vrot.lane.b32.xlu0 %v884, 32
  %v888 = vpop.permute.xlu0 %887
  %v890 = vmul.f32 %v883, %v888
  %892 = vrot.lane.b32.xlu0 %v890, 32
  %v893 = vpop.permute.xlu0 %892
  %v895 = vadd.f32 %v885, %v893
  %v896 = vtanh.pop %v895
  %898 = vrot.lane.b32.xlu0 %v896, 32
  %v899 = vpop.permute.xlu0 %898
  %v901 = vmul.f32 %v883, %v899
  %v902 = vpack.c.bf16 %v901, %v901
  %v904 = vunpack.c.l.b16 %v902
  %v905 = vpack.c.b16 %v904, %v904
  %906 = vrot.lane.b32.xlu0 %v905, 64
  %v907 = vpop.permute.xlu0 %906
  %s909 = scalar_lea.vmem %s4, 24
  %910 = vst.msk [vmem:[%s909] sm:$0xf] %vm148, %v907
  %s911 = sadd.s32 %s33, 6
  %p912 = scmp.eq.s32.totalorder %s911, 7
  // Predicated region
  $region46: #{rnn_model_forward.9} parent=0 // pred_check
    %p913 = pneg %p912
  $region47: #{rnn_model_forward.9} parent=0 // pred_check_branch
    %915 = sbr.rel (%p913) target = $region49
  $region48: #{rnn_model_forward.9} parent=0 // pred_region
    %917 = vrot.lane.b32.xlu0 %v901, 64
    %v918 = vpop.permute.xlu0 %917
    %920 = vst.msk [vmem:[%s5] sm:$0xff] %vm38, %v918
    %922 = vrot.lane.b32.xlu0 %v895, 96
    %v923 = vpop.permute.xlu0 %922
    %925 = vst.msk [vmem:[%s6] sm:$0xff] %vm38, %v923
  $region49: #{rnn_model_forward.9} parent=0 // pred_fallthru
    _
  %s926 = scalar_lea.vmem %s0, 28
  %v927 = vld [vmem:[%s926] sm:$0xf]
  %v928 = vunpack.c.l.bf16 %v927
  %930 = vrot.lane.b32.xlu0 %v901, 64
  %v931 = vpop.permute.xlu0 %930
  %v932 = vsel %vm38, %v931, 0
  %934 = vmatprep.subr.mxu0 0.0
  %935 = vmatpush1.msra.mxu0 %v29
  %936 = vmatprep.subr.mxu0 0.0
  %937 = vmatpush1.msra.mxu0 %v30
  %938 = vmatprep.subr.mxu0 0.0
  %939 = vmatpush1.msra.mxu0 %v31
  %940 = vmatprep.subr.mxu0 0.0
  %941 = vmatpush1.msra.mxu0 %v32
  %942 = vmatprep.subr.mxu0 0.0
  %943 = vmatpush1.msra.mxu0 0.0
  %944 = vmatprep.subr.mxu0 0.0
  %945 = vmatpush1.msra.mxu0 0.0
  %946 = vmatprep.subr.mxu0 0.0
  %947 = vmatpush1.msra.mxu0 0.0
  %948 = vmatprep.subr.mxu0 0.0
  %949 = vmatpush1.msra.mxu0 0.0
  %950 = vmatprep.subr.mxu0 0.0
  %951 = vmatpush1.msra.mxu0 0.0
  %952 = vmatprep.subr.mxu0 0.0
  %953 = vmatpush1.msra.mxu0 0.0
  %954 = vmatprep.subr.mxu0 0.0
  %955 = vmatpush1.msra.mxu0 0.0
  %956 = vmatprep.subr.mxu0 0.0
  %957 = vmatpush1.msra.mxu0 0.0
  %958 = vmatprep.subr.mxu0 0.0
  %959 = vmatpush1.msra.mxu0 0.0
  %960 = vmatprep.subr.mxu0 0.0
  %961 = vmatpush1.msra.mxu0 0.0
  %962 = vmatprep.subr.mxu0 0.0
  %963 = vmatpush1.msra.mxu0 0.0
  %964 = vmatprep.subr.mxu0 0.0
  %965 = vmatpush1.msra.mxu0 0.0
  %966 = vmatprep.subr.mxu0 0.0
  %967 = vmatpush1.msra.mxu0 0.0
  %968 = vmatprep.subr.mxu0 0.0
  %969 = vmatpush1.msra.mxu0 0.0
  %970 = vmatprep.subr.mxu0 0.0
  %971 = vmatpush1.msra.mxu0 0.0
  %972 = vmatprep.subr.mxu0 0.0
  %973 = vmatpush1.msra.mxu0 0.0
  %974 = vmatprep.subr.mxu0 0.0
  %975 = vmatpush1.msra.mxu0 0.0
  %976 = vmatprep.subr.mxu0 0.0
  %977 = vmatpush1.msra.mxu0 0.0
  %978 = vmatprep.subr.mxu0 0.0
  %979 = vmatpush1.msra.mxu0 0.0
  %980 = vmatprep.subr.mxu0 0.0
  %981 = vmatpush1.msra.mxu0 0.0
  %982 = vmatprep.subr.mxu0 0.0
  %983 = vmatpush1.msra.mxu0 0.0
  %984 = vmatprep.subr.mxu0 0.0
  %985 = vmatpush1.msra.mxu0 0.0
  %986 = vmatprep.subr.mxu0 0.0
  %987 = vmatpush1.msra.mxu0 0.0
  %988 = vmatprep.subr.mxu0 0.0
  %989 = vmatpush1.msra.mxu0 0.0
  %990 = vmatprep.subr.mxu0 0.0
  %991 = vmatpush1.msra.mxu0 0.0
  %992 = vmatprep.subr.mxu0 0.0
  %993 = vmatpush1.msra.mxu0 0.0
  %994 = vmatprep.subr.mxu0 0.0
  %995 = vmatpush1.msra.mxu0 0.0
  %996 = vmatprep.subr.mxu0 0.0
  %997 = vmatpush1.msra.mxu0 0.0
  %998 = vmatprep.mubr.f32.mxu0 0.0
  %999 = vmatmul.mubr.f32.gmra.mrb[0].mxu0 %v932
  %v1000 = vpop.f32.mrb[0].mxu0
  %v1001 = vadd.f32 0.0, %v1000
  %v1002 = vpop.f32.mrb[0].mxu0
  %1003 = vdwg.mxu0
  %v1004 = vadd.f32 %v928, %v1001
  %v1005 = vxor.u32 %v1004, 2147483648
  %v1006 = vmul.f32 %v1005, 1.442695
  %v1007 = vpow.pop %v1006
  %v1008 = vadd.f32 %v1007, 1.0
  %v1009 = vrcp.pop %v1008
  %v1010 = vmul.f32 1.0, %v1009
  %v1011 = vtanh.pop %v1004
  %v1012 = vmul.f32 %v1010, %v895
  %1014 = vrot.lane.b32.xlu0 %v1011, 32
  %v1015 = vpop.permute.xlu0 %1014
  %v1017 = vmul.f32 %v1010, %v1015
  %1019 = vrot.lane.b32.xlu0 %v1017, 32
  %v1020 = vpop.permute.xlu0 %1019
  %v1022 = vadd.f32 %v1012, %v1020
  %v1023 = vtanh.pop %v1022
  %1025 = vrot.lane.b32.xlu0 %v1023, 32
  %v1026 = vpop.permute.xlu0 %1025
  %v1028 = vmul.f32 %v1010, %v1026
  %v1029 = vpack.c.bf16 %v1028, %v1028
  %v1031 = vunpack.c.l.b16 %v1029
  %v1032 = vpack.c.b16 %v1031, %v1031
  %1033 = vrot.lane.b32.xlu0 %v1032, 64
  %v1034 = vpop.permute.xlu0 %1033
  %s1036 = scalar_lea.vmem %s4, 28
  %1037 = vst.msk [vmem:[%s1036] sm:$0xf] %vm148, %v1034
  %s1038 = sadd.s32 %s33, 7
  %p1039 = scmp.eq.s32.totalorder %s1038, 7
  // Predicated region
  $region50: #{rnn_model_forward.9} parent=0 // pred_check
    %p1040 = pneg %p1039
  $region51: #{rnn_model_forward.9} parent=0 // pred_check_branch
    %1042 = sbr.rel (%p1040) target = $region53
  $region52: #{rnn_model_forward.9} parent=0 // pred_region
    %1044 = vrot.lane.b32.xlu0 %v1028, 64
    %v1045 = vpop.permute.xlu0 %1044
    %1047 = vst.msk [vmem:[%s5] sm:$0xff] %vm38, %v1045
    %1049 = vrot.lane.b32.xlu0 %v1022, 96
    %v1050 = vpop.permute.xlu0 %1049
    %1052 = vst.msk [vmem:[%s6] sm:$0xff] %vm38, %v1050
  $region53: #{rnn_model_forward.9} parent=0 // pred_fallthru
    _
  %1054 = vrot.lane.b32.xlu0 %v1028, 64
  %v1055 = vpop.permute.xlu0 %1054
  %1057 = vst.msk [vmem:[#allocation2] sm:$0xff] %vm38, %v1055
  %1059 = vrot.lane.b32.xlu0 %v1022, 96
  %v1060 = vpop.permute.xlu0 %1059
  %1062 = vst.msk [vmem:[#allocation3] sm:$0xff] %vm38, %v1060
  // Predicated region
  $region54: #{rnn_model_forward.9} parent=0 // pred_check
    _
  $region55: #{rnn_model_forward.9} parent=0 // pred_check_branch
    %1064 = sbr.rel (0) target = $region57
  $region56: #{rnn_model_forward.9} parent=0 // pred_region
    _
  $region57: #{rnn_model_forward.9} parent=0 // pred_fallthru
    _
  // Predicated region
  $region58: #{rnn_model_forward.9} parent=0 // pred_check
    _
  $region59: #{rnn_model_forward.9} parent=0 // pred_check_branch
    %1066 = sbr.rel (0) target = $region61
  $region60: #{rnn_model_forward.9} parent=0 // pred_region
    _
  $region61: #{rnn_model_forward.9} parent=0 // pred_fallthru
    _
  // Predicated region
  $region62: #{rnn_model_forward.9} parent=0 // pred_check
    _
  $region63: #{rnn_model_forward.9} parent=0 // pred_check_branch
    %1068 = sbr.rel (0) target = $region65
  $region64: #{rnn_model_forward.9} parent=0 // pred_region
    _
  $region65: #{rnn_model_forward.9} parent=0 // pred_fallthru
    _
  // Predicated region
  $region66: #{rnn_model_forward.9} parent=0 // pred_check
    _
  $region67: #{rnn_model_forward.9} parent=0 // pred_check_branch
    %1070 = sbr.rel (0) target = $region69
  $region68: #{rnn_model_forward.9} parent=0 // pred_region
    _
  $region69: #{rnn_model_forward.9} parent=0 // pred_fallthru
    _
  // Predicated region
  $region70: #{rnn_model_forward.9} parent=0 // pred_check
    _
  $region71: #{rnn_model_forward.9} parent=0 // pred_check_branch
    %1072 = sbr.rel (0) target = $region73
  $region72: #{rnn_model_forward.9} parent=0 // pred_region
    _
  $region73: #{rnn_model_forward.9} parent=0 // pred_fallthru
    _
  // Predicated region
  $region74: #{rnn_model_forward.9} parent=0 // pred_check
    _
  $region75: #{rnn_model_forward.9} parent=0 // pred_check_branch
    %1074 = sbr.rel (0) target = $region77
  $region76: #{rnn_model_forward.9} parent=0 // pred_region
    _
  $region77: #{rnn_model_forward.9} parent=0 // pred_fallthru
    _

// kernel: rnn_model_forward.15
$region0: #{rnn_model_forward.15}
  #allocation0 [shape = 'u32[]', space=smem, size = 0x4, offset = 0x4, fixed_abs, tag = 'smem constant byte address 0x4 - core index']
  #allocation1 [shape = 'u32[144,128]{1,0:T(1,128)}', space=vmem, size = 0x12000, scoped, tag = 'internal scratch']
  %s0 = inlined_call_operand.vmem [shape: bf16[16,32], index: 0, kind: input, shape index: {}]
  %s1 = inlined_call_operand.vmem [shape: bf16[32,128], index: 1, kind: input, shape index: {}]
  %s2 = inlined_call_operand.vmem [shape: f32[1,128], index: 2, kind: input, shape index: {}]
  %s3 = inlined_call_operand.hbm [shape: f32[16,128], index: 3, kind: output, shape index: {}]
  %s4 = sld [smem:[#allocation0]]
  $region22: #{rnn_model_forward.15} parent=0
    _
  %s6 = ssub.s32 1, %s4
  %s7 = scalar_select 0, %s6, %s4
  $region1: #{rnn_model_forward.15} parent=0
    #allocation2 [shape = 'u8[8192]{0}', space=vmem, size = 0x2000, scoped, tag = 'output window, operand 0, single buffered']
    #allocation3 [shape = 's32[1]{0}', space=sflag, size = 0x4, scoped, tag = 'scoped memory for rnn_model_forward.15']
    %8 = vsyncpa [#allocation3], 0
    // Predicated region
    $region2: #{rnn_model_forward.15} parent=1 // pred_check
      _
    $region3: #{rnn_model_forward.15} parent=1 // pred_check_branch
      %10 = sbr.rel (0) target = $region5
    $region4: #{rnn_model_forward.15} parent=1 // pred_region
      _
    $region5: #{rnn_model_forward.15} parent=1 // pred_fallthru
      _
    // Predicated region
    $region6: #{rnn_model_forward.15} parent=1 // pred_check
      _
    $region7: #{rnn_model_forward.15} parent=1 // pred_check_branch
      %12 = sbr.rel (0) target = $region9
    $region8: #{rnn_model_forward.15} parent=1 // pred_region
      _
    $region9: #{rnn_model_forward.15} parent=1 // pred_fallthru
      _
    // Predicated region
    $region10: #{rnn_model_forward.15} parent=1 // pred_check
      _
    $region11: #{rnn_model_forward.15} parent=1 // pred_check_branch
      %14 = sbr.rel (0) target = $region13
    $region12: #{rnn_model_forward.15} parent=1 // pred_region
      _
    $region13: #{rnn_model_forward.15} parent=1 // pred_fallthru
      _
    %v16 = vld [vmem:[%s0] sm:$0xf]
    %v17 = vld [vmem:[%s0 + $0x4] sm:$0xf]
    %v18 = vld [vmem:[%s1] sm:$0xf]
    %v19 = vld [vmem:[%s1 + $0x4] sm:$0xf]
    %v20 = vld [vmem:[%s1 + $0x8] sm:$0xf]
    %v21 = vld [vmem:[%s1 + $0xc] sm:$0xf]
    %v22 = vld [vmem:[%s2] sm:$0x1]
    %v24 = vlaneseq
    %v25 = vshrl.u32 %v24, 7
    %v26 = vsub.s32 0, %v25
    %v27 = vrot.slane %v22, %v26
    %v31 = vunpack.c.l.b16 %v16
    %v32 = vunpack.c.l.b16 %v17
    %v33 = vpack.c.b16 %v32, %v31
    %v38 = vunpack.c.l.b16 %v18
    %v39 = vunpack.c.l.b16 %v19
    %v40 = vunpack.c.l.b16 %v20
    %v41 = vunpack.c.l.b16 %v21
    %v42 = vpack.c.b16 %v39, %v38
    %v43 = vpack.c.b16 %v41, %v40
    %vm46 = vcmask 261120
    %v48 = vsel %vm46, %v33, 0
    %50 = vmatprep.subr.bf16.mxu0 0
    %51 = vmatpush1.bf16.msra.mxu0 %v42
    %52 = vmatprep.subr.bf16.mxu0 0
    %53 = vmatpush1.bf16.msra.mxu0 %v43
    %54 = vmatprep.subr.bf16.mxu0 0
    %55 = vmatpush1.bf16.msra.mxu0 0
    %56 = vmatprep.subr.bf16.mxu0 0
    %57 = vmatpush1.bf16.msra.mxu0 0
    %58 = vmatprep.subr.bf16.mxu0 0
    %59 = vmatpush1.bf16.msra.mxu0 0
    %60 = vmatprep.subr.bf16.mxu0 0
    %61 = vmatpush1.bf16.msra.mxu0 0
    %62 = vmatprep.subr.bf16.mxu0 0
    %63 = vmatpush1.bf16.msra.mxu0 0
    %64 = vmatprep.subr.bf16.mxu0 0
    %65 = vmatpush1.bf16.msra.mxu0 0
    %66 = vmatprep.subr.bf16.mxu0 0
    %67 = vmatpush1.bf16.msra.mxu0 0
    %68 = vmatprep.subr.bf16.mxu0 0
    %69 = vmatpush1.bf16.msra.mxu0 0
    %70 = vmatprep.subr.bf16.mxu0 0
    %71 = vmatpush1.bf16.msra.mxu0 0
    %72 = vmatprep.subr.bf16.mxu0 0
    %73 = vmatpush1.bf16.msra.mxu0 0
    %74 = vmatprep.subr.bf16.mxu0 0
    %75 = vmatpush1.bf16.msra.mxu0 0
    %76 = vmatprep.subr.bf16.mxu0 0
    %77 = vmatpush1.bf16.msra.mxu0 0
    %78 = vmatprep.subr.bf16.mxu0 0
    %79 = vmatpush1.bf16.msra.mxu0 0
    %80 = vmatprep.subr.bf16.mxu0 0
    %81 = vmatpush1.bf16.msra.mxu0 0
    %82 = vmatprep.mubr.bf16.mxu0 0
    %83 = vmatmul.mubr.bf16.gmra.mrb[0].mxu0 %v48
    %v84 = vpop.f32.mrb[0].mxu0
    %v85 = vadd.f32 %v27, %v84
    %v86 = vpop.f32.mrb[0].mxu0
    %v87 = vpop.f32.mrb[0].mxu0
    %v88 = vadd.f32 %v27, %v87
    %v89 = vpop.f32.mrb[0].mxu0
    %90 = vdwg.mxu0
    %91 = vmax.xlane.f32.xlu0 %v85
    %v92 = vpop.xlane.xlu0 %91
    %93 = vmax.xlane.f32.xlu0 %v88
    %v94 = vpop.xlane.xlu0 %93
    %v95 = vsub.f32 %v85, %v92
    %v96 = vsub.f32 %v88, %v94
    %v97 = vmul.f32 %v95, 1.442695
    %v98 = vpow.pop %v97
    %v99 = vmul.f32 %v96, 1.442695
    %v100 = vpow.pop %v99
    %101 = vadd.xlane.f32.xlu0 %v98
    %v102 = vpop.xlane.xlu0 %101
    %103 = vadd.xlane.f32.xlu0 %v100
    %v104 = vpop.xlane.xlu0 %103
    %v105 = vlog2.pop %v102
    %v106 = vmul.f32 %v105, 0.6931472
    %v107 = vlog2.pop %v104
    %v108 = vmul.f32 %v107, 0.6931472
    %v109 = vsub.f32 %v95, %v106
    %v110 = vsub.f32 %v96, %v108
    %111 = vst [vmem:[#allocation2] sm:$0xff] %v109
    %112 = vst [vmem:[#allocation2 + $0x8] sm:$0xff] %v110
    // Predicated region
    $region14: #{rnn_model_forward.15} parent=1 // pred_check
      _
    $region15: #{rnn_model_forward.15} parent=1 // pred_check_branch
      %114 = sbr.rel (0) target = $region17
    $region16: #{rnn_model_forward.15} parent=1 // pred_region
      %s116 = ssub.s32 256, 256
      %117 = vsyncadd [#allocation3], %s116
      %s118 = sshll.u32 [#allocation2], 4
      %s119 = int_to_ptr.vmem [resolvable:$true] %s118
      %124 = dma.vmem_to_hbm [thread:$0]  %s119, 256, %s3, [#allocation3], 128, 128, 8
    $region17: #{rnn_model_forward.15} parent=1 // pred_fallthru
      _
    // Predicated region
    $region18: #{rnn_model_forward.15} parent=1 // pred_check
      _
    $region19: #{rnn_model_forward.15} parent=1 // pred_check_branch
      %126 = sbr.rel (0) target = $region21
    $region20: #{rnn_model_forward.15} parent=1 // pred_region
      %127 = dma.done [#allocation3], 256
    $region21: #{rnn_model_forward.15} parent=1 // pred_fallthru
      _
    %128 = vsyncpa [#allocation3], 1

</llo_original>
